<compile_context>
chip_gen: v7x
topology: tpu7x:2x2x1
jax: 0.10.0
libtpu: 0.0.40
codegen_flags: <defaults>
</compile_context>

<pallas_src>
import functools

import jax
import jax.numpy as jnp
from jax.experimental import pallas as pl
from jax.experimental.pallas import tpu as pltpu


def _round_up(x, m):
    return (x + m - 1) // m * m


def crossnet_mix_kernel(x_ref, vg_ref, cbd_ref, ut_ref, rep_ref, b_ref, o_ref,
                        *, n_experts, low_rank, mxu_dtype):
    # x_ref  : (TB, D)                      streamed batch tile
    # vg_ref : (n_cross, D, N_pad)          [V_cat | G^T | 0-pad], mxu_dtype
    # cbd_ref: (n_cross, E*R, E*R)          block-diagonal C, mxu_dtype
    # ut_ref : (n_cross, E*R, D)            concatenated U^T, mxu_dtype
    # rep_ref: (E, E*R)                     0/1 gate-broadcast matrix, mxu_dtype
    # b_ref  : (n_cross, D)                 biases, f32
    # o_ref  : (TB, D)
    n_cross = b_ref.shape[0]
    er = n_experts * low_rank

    x0 = x_ref[...].astype(jnp.float32)
    xi = x0
    rep = rep_ref[...]                                      # resident, cast hoisted to wrapper

    for i in range(n_cross):                                # n_cross is small -> static unroll
        b_i = b_ref[i:i + 1, :].astype(jnp.float32)         # (1, D)

        # (1) Fused V projections + gating logits: one lane-dense MXU matmul.
        vg = jnp.dot(xi.astype(mxu_dtype), vg_ref[i],
                     preferred_element_type=jnp.float32)    # (TB, N_pad) f32
        v_all = jnp.tanh(vg[:, :er])                        # (TB, E*R)
        logits = vg[:, er:er + n_experts]                   # (TB, E)

        # Softmax over experts (f32).
        logits = logits - jnp.max(logits, axis=-1, keepdims=True)
        p = jnp.exp(logits)
        gate = p / jnp.sum(p, axis=-1, keepdims=True)       # (TB, E)

        # (2) All experts' second projections as one block-diagonal matmul.
        v2 = jnp.tanh(jnp.dot(v_all.astype(mxu_dtype), cbd_ref[i],
                              preferred_element_type=jnp.float32))   # (TB, E*R)

        # (3) Broadcast softmax weights to (TB, E*R) with a tiny 0/1 matmul
        #     (avoids lane reshuffles), then (4) fold them into the U^T matmul.
        w_rep = jnp.dot(gate.astype(mxu_dtype), rep,
                        preferred_element_type=jnp.float32)          # (TB, E*R)
        u_w = jnp.dot((v2 * w_rep).astype(mxu_dtype), ut_ref[i],
                      preferred_element_type=jnp.float32)            # (TB, D)

        # sum_e w_e * x0 * (u_e + b) == x0 * (sum_e w_e * u_e + b), since sum_e w_e == 1.
        xi = x0 * (u_w + b_i) + xi

    o_ref[...] = xi.astype(o_ref.dtype)


def crossnet_mix(x, U, V, C, G, b, *, tile_b=None, mxu_dtype=jnp.bfloat16):
    """CrossNetMix forward.

    x: (B, D)
    U, V: (n_cross, n_experts, D, R)
    C:    (n_cross, n_experts, R, R)
    G:    (n_experts, D)   -- stacked gating[e].weight rows (Linear(d_in, 1, bias=False))
    b:    (n_cross, D)
    returns (B, D) in x.dtype
    """
    B, D = x.shape
    n_cross, n_experts, d_in, R = U.shape
    assert d_in == D
    er = n_experts * R
    n_pad = _round_up(er + n_experts, 128)                  # lane-dense fused-V/gate width

    # ---- wrapper-side layout plumbing (no in-kernel transposes / casts) ----
    # V_cat[i]: (D, E*R) with columns e*R:(e+1)*R = V[i][e]; gating G^T appended.
    v_cat = jnp.transpose(V, (0, 2, 1, 3)).reshape(n_cross, D, er).astype(jnp.float32)
    g_cols = jnp.broadcast_to(jnp.transpose(G).astype(jnp.float32)[None],
                              (n_cross, D, n_experts))
    pad = jnp.zeros((n_cross, D, n_pad - er - n_experts), jnp.float32)
    vg = jnp.concatenate([v_cat, g_cols, pad], axis=-1).astype(mxu_dtype)

    # Block-diagonal C[i]: (E*R, E*R), block (e,e) = C[i][e].
    eye = jnp.eye(n_experts, dtype=jnp.float32)
    c_bd = (eye[None, :, None, :, None] * C.astype(jnp.float32)[:, :, :, None, :]
            ).reshape(n_cross, er, er).astype(mxu_dtype)

    # U^T concatenated along the contraction: rows e*R:(e+1)*R = U[i][e].T.
    ut = jnp.transpose(U, (0, 1, 3, 2)).reshape(n_cross, er, D).astype(mxu_dtype)

    # 0/1 matrix so gate(TB,E) @ rep -> per-expert weights repeated R times along lanes.
    rep = jnp.repeat(jnp.eye(n_experts, dtype=jnp.float32), R, axis=1).astype(mxu_dtype)

    b_f32 = b.astype(jnp.float32)

    # ---- batch tiling / VMEM budget ----
    x_itemsize = jnp.dtype(x.dtype).itemsize
    sub = max(8, 32 // x_itemsize)                          # sublane packing: 8 f32, 16 bf16, 32 int8

    param_bytes = (vg.size * vg.dtype.itemsize + c_bd.size * c_bd.dtype.itemsize
                   + ut.size * ut.dtype.itemsize + rep.size * rep.dtype.itemsize
                   + b_f32.size * 4)

    def vmem_est(tb):
        stream = 2 * tb * D * 2 * x_itemsize                # double-buffered x + out streams
        temps = tb * 4 * (5 * D + n_pad + 4 * er)           # f32 in-kernel temporaries (xi, x0,
                                                            # vg, v_all, v2, w_rep, u_w, casts)
        return stream + temps + 2 * param_bytes             # params (<=2 buffers, conservative)

    if tile_b is None:
        tile_b = min(512, _round_up(B, sub))
    tile_b = max(sub, _round_up(int(tile_b), sub))
    budget = 28 * 2**20                                     # safe on v7x's 64 MiB / TensorCore
    while tile_b > sub and vmem_est(tile_b) > budget:
        tile_b = max(sub, _round_up(tile_b // 2, sub))

    B_pad = _round_up(B, tile_b)
    # Keep >=2 grid steps when possible so the "parallel" batch axis can shard
    # across both TensorCores on v7x.
    if B_pad // tile_b < 2:
        half = max(sub, _round_up(max(tile_b // 2, 1), sub))
        if half < tile_b and _round_up(B, half) // half >= 2:
            tile_b = half
            B_pad = _round_up(B, tile_b)

    x_in = x if B_pad == B else jnp.pad(x, ((0, B_pad - B), (0, 0)))
    grid = (B_pad // tile_b,)
    vmem_limit = int(min(40 * 2**20, max(24 * 2**20, 2 * vmem_est(tile_b))))

    kernel = functools.partial(crossnet_mix_kernel, n_experts=n_experts,
                               low_rank=R, mxu_dtype=mxu_dtype)

    def _call(single_buffer_params):
        def pspec(shape):
            nd = len(shape)
            imap = lambda i, _nd=nd: (0,) * _nd
            if single_buffer_params:
                # Resident params (constant index_map) only need one VMEM buffer.
                return pl.BlockSpec(shape, imap, pipeline_mode=pl.Buffered(1))
            return pl.BlockSpec(shape, imap)

        return pl.pallas_call(
            kernel,
            out_shape=jax.ShapeDtypeStruct((B_pad, D), x.dtype),
            grid_spec=pltpu.PrefetchScalarGridSpec(
                num_scalar_prefetch=0,
                grid=grid,
                in_specs=[
                    pl.BlockSpec((tile_b, D), lambda i: (i, 0)),   # x (streamed)
                    pspec(vg.shape),                                # V|G fused weights (resident)
                    pspec(c_bd.shape),                              # block-diag C (resident)
                    pspec(ut.shape),                                # U^T cat (resident)
                    pspec(rep.shape),                               # gate-broadcast matrix
                    pspec(b_f32.shape),                             # biases
                ],
                out_specs=pl.BlockSpec((tile_b, D), lambda i: (i, 0)),
            ),
            compiler_params=pltpu.CompilerParams(
                dimension_semantics=("parallel",),
                vmem_limit_bytes=vmem_limit,
            ),
        )(x_in, vg, c_bd, ut, rep, b_f32)

    try:
        out = _call(True)
    except Exception:
        # TODO(synk): drop this fallback once pl.Buffered(1) on resident params is
        # confirmed on all deployed jaxlib versions; it only affects param VMEM use.
        out = _call(False)

    return out if B_pad == B else out[:B]


def crossnet_mix_reference(x, U, V, C, G, b):
    """Pure-JAX reference matching the PyTorch CrossNetMix forward."""
    hp = jax.lax.Precision.HIGHEST
    n_cross, n_experts = U.shape[0], U.shape[1]
    x0 = x
    xi = x
    for i in range(n_cross):
        gate = jnp.dot(xi, G.T, precision=hp)                 # (B, E)
        w = jax.nn.softmax(gate, axis=-1)                     # softmax over experts
        out = jnp.zeros_like(xi)
        for e in range(n_experts):
            v = jnp.tanh(jnp.dot(xi, V[i, e], precision=hp))
            v = jnp.tanh(jnp.dot(v, C[i, e], precision=hp))
            u = jnp.dot(v, U[i, e].T, precision=hp)
            out = out + w[:, e:e + 1] * (x0 * (u + b[i][None, :]))
        xi = out + xi
    return xi


if __name__ == "__main__":
    key = jax.random.PRNGKey(0)
    # Small shapes consistent with the module defaults:
    B, D, R, E, NC = 8, 32, 32, 4, 2   # batch=8, d_in=32, low_rank=32, n_experts=4, n_cross=2

    ks = jax.random.split(key, 6)
    x = jax.random.normal(ks[0], (B, D), dtype=jnp.float32)

    def xavier(k, shape, fan_in, fan_out):
        std = jnp.sqrt(2.0 / (fan_in + fan_out)).astype(jnp.float32)
        return std * jax.random.normal(k, shape, dtype=jnp.float32)

    U = xavier(ks[1], (NC, E, D, R), D, R)
    V = xavier(ks[2], (NC, E, D, R), D, R)
    C = xavier(ks[3], (NC, E, R, R), R, R)
    bound = 1.0 / jnp.sqrt(jnp.float32(D))
    G = jax.random.uniform(ks[4], (E, D), dtype=jnp.float32, minval=-bound, maxval=bound)
    # Non-zero biases (as if trained) to exercise the bias path.
    b = 0.1 * jax.random.normal(ks[5], (NC, D), dtype=jnp.float32)

    ref = crossnet_mix_reference(x, U, V, C, G, b)

    # Tight check of the fused-expert kernel math with f32 MXU inputs.
    out_f32 = jax.block_until_ready(crossnet_mix(x, U, V, C, G, b, mxu_dtype=jnp.float32))
    assert out_f32.shape == (B, D)
    err_f32 = float(jnp.max(jnp.abs(out_f32 - ref)))
    assert jnp.allclose(out_f32, ref, atol=1e-2, rtol=1e-2), \
        f"f32-path mismatch vs reference, max_err={err_f32}"

    # Default perf config: bf16 MXU inputs, f32 accumulation (looser tolerance:
    # single-pass bf16 matmuls vs a HIGHEST-precision f32 reference).
    out_bf16 = jax.block_until_ready(crossnet_mix(x, U, V, C, G, b))
    assert out_bf16.shape == (B, D)
    err_bf16 = float(jnp.max(jnp.abs(out_bf16 - ref)))
    assert jnp.allclose(out_bf16, ref, atol=1e-1, rtol=1e-1), \
        f"bf16-path mismatch vs reference, max_err={err_bf16}"

    print("KERNEL_OK")
</pallas_src>

<mosaic_0001>
module attributes {stable_mosaic.version = 11 : i64} {
  func.func @crossnet_mix_kernel(%arg0: i32, %arg1: memref<8x32xf32, #tpu.memory_space<vmem>>, %arg2: memref<2x32x256xf32, #tpu.memory_space<vmem>>, %arg3: memref<2x128x128xf32, #tpu.memory_space<vmem>>, %arg4: memref<2x128x32xf32, #tpu.memory_space<vmem>>, %arg5: memref<4x128xf32, #tpu.memory_space<vmem>>, %arg6: memref<2x32xf32, #tpu.memory_space<vmem>>, %arg7: memref<8x32xf32, #tpu.memory_space<vmem>>) attributes {dimension_semantics = [#tpu.dimension_semantics<parallel>], iteration_bounds = array<i64: 1>, scalar_prefetch = 0 : i64, scratch_operands = 0 : i64, tpu.core_type = #tpu.core_type<tc>, window_params = [{transform_indices = @transform_0, window_bounds = array<i64: 8, 32>}, {pipeline_mode = #tpu.pipeline_mode<synchronous>, transform_indices = @transform_1, window_bounds = array<i64: 2, 32, 256>}, {pipeline_mode = #tpu.pipeline_mode<synchronous>, transform_indices = @transform_2, window_bounds = array<i64: 2, 128, 128>}, {pipeline_mode = #tpu.pipeline_mode<synchronous>, transform_indices = @transform_3, window_bounds = array<i64: 2, 128, 32>}, {pipeline_mode = #tpu.pipeline_mode<synchronous>, transform_indices = @transform_4, window_bounds = array<i64: 4, 128>}, {pipeline_mode = #tpu.pipeline_mode<synchronous>, transform_indices = @transform_5, window_bounds = array<i64: 2, 32>}, {transform_indices = @transform_6, window_bounds = array<i64: 8, 32>}]} {
    %c0 = arith.constant 0 : index
    %c0_0 = arith.constant 0 : index
    %0 = vector.load %arg1[%c0, %c0_0] : memref<8x32xf32, #tpu.memory_space<vmem>>, vector<8x32xf32>
    %c0_1 = arith.constant 0 : index
    %c0_2 = arith.constant 0 : index
    %1 = vector.load %arg5[%c0_1, %c0_2] : memref<4x128xf32, #tpu.memory_space<vmem>>, vector<4x128xf32>
    %c0_3 = arith.constant 0 : index
    %c0_4 = arith.constant 0 : index
    %2 = vector.load %arg6[%c0_3, %c0_4] : memref<2x32xf32, #tpu.memory_space<vmem>>, vector<1x32xf32>
    %c0_5 = arith.constant 0 : index
    %c0_6 = arith.constant 0 : index
    %c0_7 = arith.constant 0 : index
    %3 = vector.load %arg2[%c0_5, %c0_6, %c0_7] : memref<2x32x256xf32, #tpu.memory_space<vmem>>, vector<1x32x256xf32>
    %4 = vector.shape_cast %3 : vector<1x32x256xf32> to vector<32x256xf32>
    %cst = arith.constant dense<0.000000e+00> : vector<8x256xf32>
    %5 = tpu.matmul %0, %4, %cst {dimension_numbers = #tpu.dot_dimension_numbers<[1], [0], [0], [1], [0, 0, 1, 1], [], []>} : vector<8x32xf32>, vector<32x256xf32>, vector<8x256xf32> -> vector<8x256xf32>
    %6 = vector.extract_strided_slice %5 {offsets = [0, 0], sizes = [8, 128], strides = [1, 1]} : vector<8x256xf32> to vector<8x128xf32>
    %7 = math.tanh %6 : vector<8x128xf32>
    %8 = vector.extract_strided_slice %5 {offsets = [0, 128], sizes = [8, 4], strides = [1, 1]} : vector<8x256xf32> to vector<8x4xf32>
    %cst_8 = arith.constant dense<0xFF800000> : vector<8xf32>
    %9 = vector.multi_reduction <maximumf>, %8, %cst_8 [1] : vector<8x4xf32> to vector<8xf32>
    %10 = vector.shape_cast %9 : vector<8xf32> to vector<8x1xf32>
    %11 = vector.broadcast %10 : vector<8x1xf32> to vector<8x4xf32>
    %12 = arith.subf %8, %11 : vector<8x4xf32>
    %13 = math.exp %12 : vector<8x4xf32>
    %cst_9 = arith.constant dense<0.000000e+00> : vector<8xf32>
    %14 = vector.multi_reduction <add>, %13, %cst_9 [1] : vector<8x4xf32> to vector<8xf32>
    %15 = vector.shape_cast %14 : vector<8xf32> to vector<8x1xf32>
    %16 = vector.broadcast %15 : vector<8x1xf32> to vector<8x4xf32>
    %17 = arith.divf %13, %16 : vector<8x4xf32>
    %c0_10 = arith.constant 0 : index
    %c0_11 = arith.constant 0 : index
    %c0_12 = arith.constant 0 : index
    %18 = vector.load %arg3[%c0_10, %c0_11, %c0_12] : memref<2x128x128xf32, #tpu.memory_space<vmem>>, vector<1x128x128xf32>
    %19 = vector.shape_cast %18 : vector<1x128x128xf32> to vector<128x128xf32>
    %cst_13 = arith.constant dense<0.000000e+00> : vector<8x128xf32>
    %20 = tpu.matmul %7, %19, %cst_13 {dimension_numbers = #tpu.dot_dimension_numbers<[1], [0], [0], [1], [0, 0, 1, 1], [], []>} : vector<8x128xf32>, vector<128x128xf32>, vector<8x128xf32> -> vector<8x128xf32>
    %21 = math.tanh %20 : vector<8x128xf32>
    %cst_14 = arith.constant dense<0.000000e+00> : vector<8x128xf32>
    %22 = tpu.matmul %17, %1, %cst_14 {dimension_numbers = #tpu.dot_dimension_numbers<[1], [0], [0], [1], [0, 0, 1, 1], [], []>} : vector<8x4xf32>, vector<4x128xf32>, vector<8x128xf32> -> vector<8x128xf32>
    %23 = arith.mulf %21, %22 : vector<8x128xf32>
    %c0_15 = arith.constant 0 : index
    %c0_16 = arith.constant 0 : index
    %c0_17 = arith.constant 0 : index
    %24 = vector.load %arg4[%c0_15, %c0_16, %c0_17] : memref<2x128x32xf32, #tpu.memory_space<vmem>>, vector<1x128x32xf32>
    %25 = vector.shape_cast %24 : vector<1x128x32xf32> to vector<128x32xf32>
    %cst_18 = arith.constant dense<0.000000e+00> : vector<8x32xf32>
    %26 = tpu.matmul %23, %25, %cst_18 {dimension_numbers = #tpu.dot_dimension_numbers<[1], [0], [0], [1], [0, 0, 1, 1], [], []>} : vector<8x128xf32>, vector<128x32xf32>, vector<8x32xf32> -> vector<8x32xf32>
    %27 = vector.broadcast %2 : vector<1x32xf32> to vector<8x32xf32>
    %28 = arith.addf %26, %27 : vector<8x32xf32>
    %29 = arith.mulf %0, %28 : vector<8x32xf32>
    %30 = arith.addf %29, %0 : vector<8x32xf32>
    %c1 = arith.constant 1 : index
    %c0_19 = arith.constant 0 : index
    %31 = vector.load %arg6[%c1, %c0_19] : memref<2x32xf32, #tpu.memory_space<vmem>>, vector<1x32xf32>
    %c1_20 = arith.constant 1 : index
    %c0_21 = arith.constant 0 : index
    %c0_22 = arith.constant 0 : index
    %32 = vector.load %arg2[%c1_20, %c0_21, %c0_22] : memref<2x32x256xf32, #tpu.memory_space<vmem>>, vector<1x32x256xf32>
    %33 = vector.shape_cast %32 : vector<1x32x256xf32> to vector<32x256xf32>
    %cst_23 = arith.constant dense<0.000000e+00> : vector<8x256xf32>
    %34 = tpu.matmul %30, %33, %cst_23 {dimension_numbers = #tpu.dot_dimension_numbers<[1], [0], [0], [1], [0, 0, 1, 1], [], []>} : vector<8x32xf32>, vector<32x256xf32>, vector<8x256xf32> -> vector<8x256xf32>
    %35 = vector.extract_strided_slice %34 {offsets = [0, 0], sizes = [8, 128], strides = [1, 1]} : vector<8x256xf32> to vector<8x128xf32>
    %36 = math.tanh %35 : vector<8x128xf32>
    %37 = vector.extract_strided_slice %34 {offsets = [0, 128], sizes = [8, 4], strides = [1, 1]} : vector<8x256xf32> to vector<8x4xf32>
    %cst_24 = arith.constant dense<0xFF800000> : vector<8xf32>
    %38 = vector.multi_reduction <maximumf>, %37, %cst_24 [1] : vector<8x4xf32> to vector<8xf32>
    %39 = vector.shape_cast %38 : vector<8xf32> to vector<8x1xf32>
    %40 = vector.broadcast %39 : vector<8x1xf32> to vector<8x4xf32>
    %41 = arith.subf %37, %40 : vector<8x4xf32>
    %42 = math.exp %41 : vector<8x4xf32>
    %cst_25 = arith.constant dense<0.000000e+00> : vector<8xf32>
    %43 = vector.multi_reduction <add>, %42, %cst_25 [1] : vector<8x4xf32> to vector<8xf32>
    %44 = vector.shape_cast %43 : vector<8xf32> to vector<8x1xf32>
    %45 = vector.broadcast %44 : vector<8x1xf32> to vector<8x4xf32>
    %46 = arith.divf %42, %45 : vector<8x4xf32>
    %c1_26 = arith.constant 1 : index
    %c0_27 = arith.constant 0 : index
    %c0_28 = arith.constant 0 : index
    %47 = vector.load %arg3[%c1_26, %c0_27, %c0_28] : memref<2x128x128xf32, #tpu.memory_space<vmem>>, vector<1x128x128xf32>
    %48 = vector.shape_cast %47 : vector<1x128x128xf32> to vector<128x128xf32>
    %cst_29 = arith.constant dense<0.000000e+00> : vector<8x128xf32>
    %49 = tpu.matmul %36, %48, %cst_29 {dimension_numbers = #tpu.dot_dimension_numbers<[1], [0], [0], [1], [0, 0, 1, 1], [], []>} : vector<8x128xf32>, vector<128x128xf32>, vector<8x128xf32> -> vector<8x128xf32>
    %50 = math.tanh %49 : vector<8x128xf32>
    %cst_30 = arith.constant dense<0.000000e+00> : vector<8x128xf32>
    %51 = tpu.matmul %46, %1, %cst_30 {dimension_numbers = #tpu.dot_dimension_numbers<[1], [0], [0], [1], [0, 0, 1, 1], [], []>} : vector<8x4xf32>, vector<4x128xf32>, vector<8x128xf32> -> vector<8x128xf32>
    %52 = arith.mulf %50, %51 : vector<8x128xf32>
    %c1_31 = arith.constant 1 : index
    %c0_32 = arith.constant 0 : index
    %c0_33 = arith.constant 0 : index
    %53 = vector.load %arg4[%c1_31, %c0_32, %c0_33] : memref<2x128x32xf32, #tpu.memory_space<vmem>>, vector<1x128x32xf32>
    %54 = vector.shape_cast %53 : vector<1x128x32xf32> to vector<128x32xf32>
    %cst_34 = arith.constant dense<0.000000e+00> : vector<8x32xf32>
    %55 = tpu.matmul %52, %54, %cst_34 {dimension_numbers = #tpu.dot_dimension_numbers<[1], [0], [0], [1], [0, 0, 1, 1], [], []>} : vector<8x128xf32>, vector<128x32xf32>, vector<8x32xf32> -> vector<8x32xf32>
    %56 = vector.broadcast %31 : vector<1x32xf32> to vector<8x32xf32>
    %57 = arith.addf %55, %56 : vector<8x32xf32>
    %58 = arith.mulf %0, %57 : vector<8x32xf32>
    %59 = arith.addf %58, %30 : vector<8x32xf32>
    %c0_35 = arith.constant 0 : index
    %c0_36 = arith.constant 0 : index
    %60 = vector.load %arg7[%c0_35, %c0_36] : memref<8x32xf32, #tpu.memory_space<vmem>>, vector<8x32xf32>
    tpu.vector_store %arg7[%c0_35, %c0_36], %59 {strides = array<i32>} : memref<8x32xf32, #tpu.memory_space<vmem>>, vector<8x32xf32>,
    return
  }
  func.func @transform_0(%arg0: i32) -> (i32, i32) {
    %c0_i32 = arith.constant 0 : i32
    %c0_i32_0 = arith.constant 0 : i32
    return %arg0, %c0_i32 : i32, i32
  }
  func.func @transform_1(%arg0: i32) -> (i32, i32, i32) {
    %c0_i32 = arith.constant 0 : i32
    %c0_i32_0 = arith.constant 0 : i32
    %c0_i32_1 = arith.constant 0 : i32
    %c0_i32_2 = arith.constant 0 : i32
    return %c0_i32, %c0_i32_0, %c0_i32_1 : i32, i32, i32
  }
  func.func @transform_2(%arg0: i32) -> (i32, i32, i32) {
    %c0_i32 = arith.constant 0 : i32
    %c0_i32_0 = arith.constant 0 : i32
    %c0_i32_1 = arith.constant 0 : i32
    %c0_i32_2 = arith.constant 0 : i32
    return %c0_i32, %c0_i32_0, %c0_i32_1 : i32, i32, i32
  }
  func.func @transform_3(%arg0: i32) -> (i32, i32, i32) {
    %c0_i32 = arith.constant 0 : i32
    %c0_i32_0 = arith.constant 0 : i32
    %c0_i32_1 = arith.constant 0 : i32
    %c0_i32_2 = arith.constant 0 : i32
    return %c0_i32, %c0_i32_0, %c0_i32_1 : i32, i32, i32
  }
  func.func @transform_4(%arg0: i32) -> (i32, i32) {
    %c0_i32 = arith.constant 0 : i32
    %c0_i32_0 = arith.constant 0 : i32
    %c0_i32_1 = arith.constant 0 : i32
    return %c0_i32, %c0_i32_0 : i32, i32
  }
  func.func @transform_5(%arg0: i32) -> (i32, i32) {
    %c0_i32 = arith.constant 0 : i32
    %c0_i32_0 = arith.constant 0 : i32
    %c0_i32_1 = arith.constant 0 : i32
    return %c0_i32, %c0_i32_0 : i32, i32
  }
  func.func @transform_6(%arg0: i32) -> (i32, i32) {
    %c0_i32 = arith.constant 0 : i32
    %c0_i32_0 = arith.constant 0 : i32
    return %arg0, %c0_i32 : i32, i32
  }
}

module attributes {stable_mosaic.version = 11 : i64} {
  func.func @crossnet_mix_kernel(%arg0: i32, %arg1: memref<8x32xf32, #tpu.memory_space<vmem>>, %arg2: memref<2x32x256xf32, #tpu.memory_space<vmem>>, %arg3: memref<2x128x128xf32, #tpu.memory_space<vmem>>, %arg4: memref<2x128x32xf32, #tpu.memory_space<vmem>>, %arg5: memref<4x128xf32, #tpu.memory_space<vmem>>, %arg6: memref<2x32xf32, #tpu.memory_space<vmem>>, %arg7: memref<8x32xf32, #tpu.memory_space<vmem>>) attributes {dimension_semantics = [#tpu.dimension_semantics<parallel>], iteration_bounds = array<i64: 1>, scalar_prefetch = 0 : i64, scratch_operands = 0 : i64, tpu.core_type = #tpu.core_type<tc>, window_params = [{transform_indices = @transform_0, window_bounds = array<i64: 8, 32>}, {pipeline_mode = #tpu.pipeline_mode<synchronous>, transform_indices = @transform_1, window_bounds = array<i64: 2, 32, 256>}, {pipeline_mode = #tpu.pipeline_mode<synchronous>, transform_indices = @transform_2, window_bounds = array<i64: 2, 128, 128>}, {pipeline_mode = #tpu.pipeline_mode<synchronous>, transform_indices = @transform_3, window_bounds = array<i64: 2, 128, 32>}, {pipeline_mode = #tpu.pipeline_mode<synchronous>, transform_indices = @transform_4, window_bounds = array<i64: 4, 128>}, {pipeline_mode = #tpu.pipeline_mode<synchronous>, transform_indices = @transform_5, window_bounds = array<i64: 2, 32>}, {transform_indices = @transform_6, window_bounds = array<i64: 8, 32>}]} {
    %c0 = arith.constant 0 : index
    %c0_0 = arith.constant 0 : index
    %0 = vector.load %arg1[%c0, %c0_0] : memref<8x32xf32, #tpu.memory_space<vmem>>, vector<8x32xf32>
    %c0_1 = arith.constant 0 : index
    %c0_2 = arith.constant 0 : index
    %1 = vector.load %arg5[%c0_1, %c0_2] : memref<4x128xf32, #tpu.memory_space<vmem>>, vector<4x128xf32>
    %c0_3 = arith.constant 0 : index
    %c0_4 = arith.constant 0 : index
    %2 = vector.load %arg6[%c0_3, %c0_4] : memref<2x32xf32, #tpu.memory_space<vmem>>, vector<1x32xf32>
    %c0_5 = arith.constant 0 : index
    %c0_6 = arith.constant 0 : index
    %c0_7 = arith.constant 0 : index
    %3 = vector.load %arg2[%c0_5, %c0_6, %c0_7] : memref<2x32x256xf32, #tpu.memory_space<vmem>>, vector<1x32x256xf32>
    %4 = vector.shape_cast %3 : vector<1x32x256xf32> to vector<32x256xf32>
    %cst = arith.constant dense<0.000000e+00> : vector<8x256xf32>
    %5 = tpu.matmul %0, %4, %cst {dimension_numbers = #tpu.dot_dimension_numbers<[1], [0], [0], [1], [0, 0, 1, 1], [], []>} : vector<8x32xf32>, vector<32x256xf32>, vector<8x256xf32> -> vector<8x256xf32>
    %6 = vector.extract_strided_slice %5 {offsets = [0, 0], sizes = [8, 128], strides = [1, 1]} : vector<8x256xf32> to vector<8x128xf32>
    %7 = math.tanh %6 : vector<8x128xf32>
    %8 = vector.extract_strided_slice %5 {offsets = [0, 128], sizes = [8, 4], strides = [1, 1]} : vector<8x256xf32> to vector<8x4xf32>
    %cst_8 = arith.constant dense<0xFF800000> : vector<8xf32>
    %9 = vector.multi_reduction <maximumf>, %8, %cst_8 [1] : vector<8x4xf32> to vector<8xf32>
    %10 = vector.shape_cast %9 : vector<8xf32> to vector<8x1xf32>
    %11 = vector.broadcast %10 : vector<8x1xf32> to vector<8x4xf32>
    %12 = arith.subf %8, %11 : vector<8x4xf32>
    %13 = math.exp %12 : vector<8x4xf32>
    %cst_9 = arith.constant dense<0.000000e+00> : vector<8xf32>
    %14 = vector.multi_reduction <add>, %13, %cst_9 [1] : vector<8x4xf32> to vector<8xf32>
    %15 = vector.shape_cast %14 : vector<8xf32> to vector<8x1xf32>
    %16 = vector.broadcast %15 : vector<8x1xf32> to vector<8x4xf32>
    %17 = arith.divf %13, %16 : vector<8x4xf32>
    %c0_10 = arith.constant 0 : index
    %c0_11 = arith.constant 0 : index
    %c0_12 = arith.constant 0 : index
    %18 = vector.load %arg3[%c0_10, %c0_11, %c0_12] : memref<2x128x128xf32, #tpu.memory_space<vmem>>, vector<1x128x128xf32>
    %19 = vector.shape_cast %18 : vector<1x128x128xf32> to vector<128x128xf32>
    %cst_13 = arith.constant dense<0.000000e+00> : vector<8x128xf32>
    %20 = tpu.matmul %7, %19, %cst_13 {dimension_numbers = #tpu.dot_dimension_numbers<[1], [0], [0], [1], [0, 0, 1, 1], [], []>} : vector<8x128xf32>, vector<128x128xf32>, vector<8x128xf32> -> vector<8x128xf32>
    %21 = math.tanh %20 : vector<8x128xf32>
    %cst_14 = arith.constant dense<0.000000e+00> : vector<8x128xf32>
    %22 = tpu.matmul %17, %1, %cst_14 {dimension_numbers = #tpu.dot_dimension_numbers<[1], [0], [0], [1], [0, 0, 1, 1], [], []>} : vector<8x4xf32>, vector<4x128xf32>, vector<8x128xf32> -> vector<8x128xf32>
    %23 = arith.mulf %21, %22 : vector<8x128xf32>
    %c0_15 = arith.constant 0 : index
    %c0_16 = arith.constant 0 : index
    %c0_17 = arith.constant 0 : index
    %24 = vector.load %arg4[%c0_15, %c0_16, %c0_17] : memref<2x128x32xf32, #tpu.memory_space<vmem>>, vector<1x128x32xf32>
    %25 = vector.shape_cast %24 : vector<1x128x32xf32> to vector<128x32xf32>
    %cst_18 = arith.constant dense<0.000000e+00> : vector<8x32xf32>
    %26 = tpu.matmul %23, %25, %cst_18 {dimension_numbers = #tpu.dot_dimension_numbers<[1], [0], [0], [1], [0, 0, 1, 1], [], []>} : vector<8x128xf32>, vector<128x32xf32>, vector<8x32xf32> -> vector<8x32xf32>
    %27 = vector.broadcast %2 : vector<1x32xf32> to vector<8x32xf32>
    %28 = arith.addf %26, %27 : vector<8x32xf32>
    %29 = arith.mulf %0, %28 : vector<8x32xf32>
    %30 = arith.addf %29, %0 : vector<8x32xf32>
    %c1 = arith.constant 1 : index
    %c0_19 = arith.constant 0 : index
    %31 = vector.load %arg6[%c1, %c0_19] : memref<2x32xf32, #tpu.memory_space<vmem>>, vector<1x32xf32>
    %c1_20 = arith.constant 1 : index
    %c0_21 = arith.constant 0 : index
    %c0_22 = arith.constant 0 : index
    %32 = vector.load %arg2[%c1_20, %c0_21, %c0_22] : memref<2x32x256xf32, #tpu.memory_space<vmem>>, vector<1x32x256xf32>
    %33 = vector.shape_cast %32 : vector<1x32x256xf32> to vector<32x256xf32>
    %cst_23 = arith.constant dense<0.000000e+00> : vector<8x256xf32>
    %34 = tpu.matmul %30, %33, %cst_23 {dimension_numbers = #tpu.dot_dimension_numbers<[1], [0], [0], [1], [0, 0, 1, 1], [], []>} : vector<8x32xf32>, vector<32x256xf32>, vector<8x256xf32> -> vector<8x256xf32>
    %35 = vector.extract_strided_slice %34 {offsets = [0, 0], sizes = [8, 128], strides = [1, 1]} : vector<8x256xf32> to vector<8x128xf32>
    %36 = math.tanh %35 : vector<8x128xf32>
    %37 = vector.extract_strided_slice %34 {offsets = [0, 128], sizes = [8, 4], strides = [1, 1]} : vector<8x256xf32> to vector<8x4xf32>
    %cst_24 = arith.constant dense<0xFF800000> : vector<8xf32>
    %38 = vector.multi_reduction <maximumf>, %37, %cst_24 [1] : vector<8x4xf32> to vector<8xf32>
    %39 = vector.shape_cast %38 : vector<8xf32> to vector<8x1xf32>
    %40 = vector.broadcast %39 : vector<8x1xf32> to vector<8x4xf32>
    %41 = arith.subf %37, %40 : vector<8x4xf32>
    %42 = math.exp %41 : vector<8x4xf32>
    %cst_25 = arith.constant dense<0.000000e+00> : vector<8xf32>
    %43 = vector.multi_reduction <add>, %42, %cst_25 [1] : vector<8x4xf32> to vector<8xf32>
    %44 = vector.shape_cast %43 : vector<8xf32> to vector<8x1xf32>
    %45 = vector.broadcast %44 : vector<8x1xf32> to vector<8x4xf32>
    %46 = arith.divf %42, %45 : vector<8x4xf32>
    %c1_26 = arith.constant 1 : index
    %c0_27 = arith.constant 0 : index
    %c0_28 = arith.constant 0 : index
    %47 = vector.load %arg3[%c1_26, %c0_27, %c0_28] : memref<2x128x128xf32, #tpu.memory_space<vmem>>, vector<1x128x128xf32>
    %48 = vector.shape_cast %47 : vector<1x128x128xf32> to vector<128x128xf32>
    %cst_29 = arith.constant dense<0.000000e+00> : vector<8x128xf32>
    %49 = tpu.matmul %36, %48, %cst_29 {dimension_numbers = #tpu.dot_dimension_numbers<[1], [0], [0], [1], [0, 0, 1, 1], [], []>} : vector<8x128xf32>, vector<128x128xf32>, vector<8x128xf32> -> vector<8x128xf32>
    %50 = math.tanh %49 : vector<8x128xf32>
    %cst_30 = arith.constant dense<0.000000e+00> : vector<8x128xf32>
    %51 = tpu.matmul %46, %1, %cst_30 {dimension_numbers = #tpu.dot_dimension_numbers<[1], [0], [0], [1], [0, 0, 1, 1], [], []>} : vector<8x4xf32>, vector<4x128xf32>, vector<8x128xf32> -> vector<8x128xf32>
    %52 = arith.mulf %50, %51 : vector<8x128xf32>
    %c1_31 = arith.constant 1 : index
    %c0_32 = arith.constant 0 : index
    %c0_33 = arith.constant 0 : index
    %53 = vector.load %arg4[%c1_31, %c0_32, %c0_33] : memref<2x128x32xf32, #tpu.memory_space<vmem>>, vector<1x128x32xf32>
    %54 = vector.shape_cast %53 : vector<1x128x32xf32> to vector<128x32xf32>
    %cst_34 = arith.constant dense<0.000000e+00> : vector<8x32xf32>
    %55 = tpu.matmul %52, %54, %cst_34 {dimension_numbers = #tpu.dot_dimension_numbers<[1], [0], [0], [1], [0, 0, 1, 1], [], []>} : vector<8x128xf32>, vector<128x32xf32>, vector<8x32xf32> -> vector<8x32xf32>
    %56 = vector.broadcast %31 : vector<1x32xf32> to vector<8x32xf32>
    %57 = arith.addf %55, %56 : vector<8x32xf32>
    %58 = arith.mulf %0, %57 : vector<8x32xf32>
    %59 = arith.addf %58, %30 : vector<8x32xf32>
    %c0_35 = arith.constant 0 : index
    %c0_36 = arith.constant 0 : index
    %60 = vector.load %arg7[%c0_35, %c0_36] : memref<8x32xf32, #tpu.memory_space<vmem>>, vector<8x32xf32>
    tpu.vector_store %arg7[%c0_35, %c0_36], %59 {strides = array<i32>} : memref<8x32xf32, #tpu.memory_space<vmem>>, vector<8x32xf32>,
    return
  }
  func.func @transform_0(%arg0: i32) -> (i32, i32) {
    %c0_i32 = arith.constant 0 : i32
    %c0_i32_0 = arith.constant 0 : i32
    return %arg0, %c0_i32 : i32, i32
  }
  func.func @transform_1(%arg0: i32) -> (i32, i32, i32) {
    %c0_i32 = arith.constant 0 : i32
    %c0_i32_0 = arith.constant 0 : i32
    %c0_i32_1 = arith.constant 0 : i32
    %c0_i32_2 = arith.constant 0 : i32
    return %c0_i32, %c0_i32_0, %c0_i32_1 : i32, i32, i32
  }
  func.func @transform_2(%arg0: i32) -> (i32, i32, i32) {
    %c0_i32 = arith.constant 0 : i32
    %c0_i32_0 = arith.constant 0 : i32
    %c0_i32_1 = arith.constant 0 : i32
    %c0_i32_2 = arith.constant 0 : i32
    return %c0_i32, %c0_i32_0, %c0_i32_1 : i32, i32, i32
  }
  func.func @transform_3(%arg0: i32) -> (i32, i32, i32) {
    %c0_i32 = arith.constant 0 : i32
    %c0_i32_0 = arith.constant 0 : i32
    %c0_i32_1 = arith.constant 0 : i32
    %c0_i32_2 = arith.constant 0 : i32
    return %c0_i32, %c0_i32_0, %c0_i32_1 : i32, i32, i32
  }
  func.func @transform_4(%arg0: i32) -> (i32, i32) {
    %c0_i32 = arith.constant 0 : i32
    %c0_i32_0 = arith.constant 0 : i32
    %c0_i32_1 = arith.constant 0 : i32
    return %c0_i32, %c0_i32_0 : i32, i32
  }
  func.func @transform_5(%arg0: i32) -> (i32, i32) {
    %c0_i32 = arith.constant 0 : i32
    %c0_i32_0 = arith.constant 0 : i32
    %c0_i32_1 = arith.constant 0 : i32
    return %c0_i32, %c0_i32_0 : i32, i32
  }
  func.func @transform_6(%arg0: i32) -> (i32, i32) {
    %c0_i32 = arith.constant 0 : i32
    %c0_i32_0 = arith.constant 0 : i32
    return %arg0, %c0_i32 : i32, i32
  }
}

</mosaic_0001>

<llo_original>
// kernel: tpu_custom_call.1
$region0: #{tpu_custom_call.1}
  #allocation0 [shape = 'u32[]', space=smem, size = 0x4, offset = 0x4, fixed_abs, tag = 'smem constant byte address 0x4 - core index']
  #allocation1 [shape = 'u32[144,128]{1,0:T(1,128)}', space=vmem, size = 0x12000, scoped, tag = 'internal scratch']
  %s0 = inlined_call_operand.vmem [shape: f32[8,32], index: 0, kind: input, shape index: {}]
  %s1 = inlined_call_operand.hbm [shape: f32[2,32,256], index: 1, kind: input, shape index: {}]
  %s2 = inlined_call_operand.vmem [shape: f32[2,128,128], index: 2, kind: input, shape index: {}]
  %s3 = inlined_call_operand.vmem [shape: f32[2,128,32], index: 3, kind: input, shape index: {}]
  %s4 = inlined_call_operand.vmem [shape: f32[4,128], index: 4, kind: input, shape index: {}]
  %s5 = inlined_call_operand.vmem [shape: f32[2,32], index: 5, kind: input, shape index: {}]
  %s6 = inlined_call_operand.hbm [shape: f32[8,32], index: 6, kind: output, shape index: {}]
  %s7 = sld [smem:[#allocation0]]
  $region38: #{tpu_custom_call.1} parent=0
    _
  %s9 = ssub.s32 1, %s7
  %s10 = scalar_select 0, %s9, %s7
  $region1: #{tpu_custom_call.1} parent=0
    #allocation2 [shape = 'u8[65536]{0}', space=vmem, size = 0x10000, scoped, tag = 'input window, operand 1, single buffered']
    #allocation3 [shape = 's32[1]{0}', space=sflag, size = 0x4, scoped, tag = 'scoped memory for tpu_custom_call.1']
    #allocation4 [shape = 's32[1]{0}', space=sflag, size = 0x4, scoped, tag = 'scoped memory for tpu_custom_call.1']
    #allocation5 [shape = 'u8[4096]{0}', space=vmem, size = 0x1000, scoped, tag = 'output window, operand 0, single buffered']
    %11 = vsyncpa [#allocation3], 0
    %12 = vsyncpa [#allocation4], 0
    // Predicated region
    $region2: #{tpu_custom_call.1} parent=1 // pred_check
      _
    $region3: #{tpu_custom_call.1} parent=1 // pred_check_branch
      %14 = sbr.rel (0) target = $region5
    $region4: #{tpu_custom_call.1} parent=1 // pred_region
      _
    $region5: #{tpu_custom_call.1} parent=1 // pred_fallthru
      _
    // Predicated region
    $region6: #{tpu_custom_call.1} parent=1 // pred_check
      _
    $region7: #{tpu_custom_call.1} parent=1 // pred_check_branch
      %16 = sbr.rel (0) target = $region9
    $region8: #{tpu_custom_call.1} parent=1 // pred_region
      %s18 = ssub.s32 2048, 2048
      %19 = vsyncadd [#allocation3], %s18
      %s20 = sshll.u32 [#allocation2], 4
      %s21 = int_to_ptr.vmem [resolvable:$true] %s20
      %26 = dma.hbm_to_vmem [thread:$0]  %s1, 2048, %s21, [#allocation3], 256, 256, 16
    $region9: #{tpu_custom_call.1} parent=1 // pred_fallthru
      _
    // Predicated region
    $region10: #{tpu_custom_call.1} parent=1 // pred_check
      _
    $region11: #{tpu_custom_call.1} parent=1 // pred_check_branch
      %28 = sbr.rel (0) target = $region13
    $region12: #{tpu_custom_call.1} parent=1 // pred_region
      _
    $region13: #{tpu_custom_call.1} parent=1 // pred_fallthru
      _
    // Predicated region
    $region14: #{tpu_custom_call.1} parent=1 // pred_check
      _
    $region15: #{tpu_custom_call.1} parent=1 // pred_check_branch
      %30 = sbr.rel (0) target = $region17
    $region16: #{tpu_custom_call.1} parent=1 // pred_region
      _
    $region17: #{tpu_custom_call.1} parent=1 // pred_fallthru
      _
    // Predicated region
    $region18: #{tpu_custom_call.1} parent=1 // pred_check
      _
    $region19: #{tpu_custom_call.1} parent=1 // pred_check_branch
      %32 = sbr.rel (0) target = $region21
    $region20: #{tpu_custom_call.1} parent=1 // pred_region
      _
    $region21: #{tpu_custom_call.1} parent=1 // pred_fallthru
      _
    // Predicated region
    $region22: #{tpu_custom_call.1} parent=1 // pred_check
      _
    $region23: #{tpu_custom_call.1} parent=1 // pred_check_branch
      %34 = sbr.rel (0) target = $region25
    $region24: #{tpu_custom_call.1} parent=1 // pred_region
      _
    $region25: #{tpu_custom_call.1} parent=1 // pred_fallthru
      _
    // Predicated region
    $region26: #{tpu_custom_call.1} parent=1 // pred_check
      _
    $region27: #{tpu_custom_call.1} parent=1 // pred_check_branch
      %36 = sbr.rel (0) target = $region29
    $region28: #{tpu_custom_call.1} parent=1 // pred_region
      %37 = dma.done [#allocation3], 2048
    $region29: #{tpu_custom_call.1} parent=1 // pred_fallthru
      _
    %v38 = vld [vmem:[%s0] sm:$0xff]
    %v39 = vld [vmem:[%s4] sm:$0xf]
    %v40 = vld [vmem:[%s5] sm:$0x1]
    %v41 = vld [vmem:[#allocation2] sm:$0xff]
    %v42 = vld [vmem:[#allocation2 + $0x8] sm:$0xff]
    %v43 = vld [vmem:[#allocation2 + $0x10] sm:$0xff]
    %v44 = vld [vmem:[#allocation2 + $0x18] sm:$0xff]
    %v45 = vld [vmem:[#allocation2 + $0x20] sm:$0xff]
    %v46 = vld [vmem:[#allocation2 + $0x28] sm:$0xff]
    %v47 = vld [vmem:[#allocation2 + $0x30] sm:$0xff]
    %v48 = vld [vmem:[#allocation2 + $0x38] sm:$0xff]
    %vm49 = vcmask 261120
    %v51 = vsel %vm49, %v38, 0
    %53 = vmatprep.subr.mxu0 %v42
    %54 = vmatpush1.msra.mxu0 %v41
    %55 = vmatprep.subr.mxu0 %v44
    %56 = vmatpush1.msra.mxu0 %v43
    %57 = vmatprep.subr.mxu0 %v46
    %58 = vmatpush1.msra.mxu0 %v45
    %59 = vmatprep.subr.mxu0 %v48
    %60 = vmatpush1.msra.mxu0 %v47
    %61 = vmatprep.subr.mxu0 0.0
    %62 = vmatpush1.msra.mxu0 0.0
    %63 = vmatprep.subr.mxu0 0.0
    %64 = vmatpush1.msra.mxu0 0.0
    %65 = vmatprep.subr.mxu0 0.0
    %66 = vmatpush1.msra.mxu0 0.0
    %67 = vmatprep.subr.mxu0 0.0
    %68 = vmatpush1.msra.mxu0 0.0
    %69 = vmatprep.subr.mxu0 0.0
    %70 = vmatpush1.msra.mxu0 0.0
    %71 = vmatprep.subr.mxu0 0.0
    %72 = vmatpush1.msra.mxu0 0.0
    %73 = vmatprep.subr.mxu0 0.0
    %74 = vmatpush1.msra.mxu0 0.0
    %75 = vmatprep.subr.mxu0 0.0
    %76 = vmatpush1.msra.mxu0 0.0
    %77 = vmatprep.subr.mxu0 0.0
    %78 = vmatpush1.msra.mxu0 0.0
    %79 = vmatprep.subr.mxu0 0.0
    %80 = vmatpush1.msra.mxu0 0.0
    %81 = vmatprep.subr.mxu0 0.0
    %82 = vmatpush1.msra.mxu0 0.0
    %83 = vmatprep.subr.mxu0 0.0
    %84 = vmatpush1.msra.mxu0 0.0
    %85 = vmatprep.subr.mxu0 0.0
    %86 = vmatpush1.msra.mxu0 0.0
    %87 = vmatprep.subr.mxu0 0.0
    %88 = vmatpush1.msra.mxu0 0.0
    %89 = vmatprep.subr.mxu0 0.0
    %90 = vmatpush1.msra.mxu0 0.0
    %91 = vmatprep.subr.mxu0 0.0
    %92 = vmatpush1.msra.mxu0 0.0
    %93 = vmatprep.subr.mxu0 0.0
    %94 = vmatpush1.msra.mxu0 0.0
    %95 = vmatprep.subr.mxu0 0.0
    %96 = vmatpush1.msra.mxu0 0.0
    %97 = vmatprep.subr.mxu0 0.0
    %98 = vmatpush1.msra.mxu0 0.0
    %99 = vmatprep.subr.mxu0 0.0
    %100 = vmatpush1.msra.mxu0 0.0
    %101 = vmatprep.subr.mxu0 0.0
    %102 = vmatpush1.msra.mxu0 0.0
    %103 = vmatprep.subr.mxu0 0.0
    %104 = vmatpush1.msra.mxu0 0.0
    %105 = vmatprep.subr.mxu0 0.0
    %106 = vmatpush1.msra.mxu0 0.0
    %107 = vmatprep.subr.mxu0 0.0
    %108 = vmatpush1.msra.mxu0 0.0
    %109 = vmatprep.subr.mxu0 0.0
    %110 = vmatpush1.msra.mxu0 0.0
    %111 = vmatprep.subr.mxu0 0.0
    %112 = vmatpush1.msra.mxu0 0.0
    %113 = vmatprep.subr.mxu0 0.0
    %114 = vmatpush1.msra.mxu0 0.0
    %115 = vmatprep.subr.mxu0 0.0
    %116 = vmatpush1.msra.mxu0 0.0
    %117 = vmatprep.mubr.f32.mxu0 0.0
    %118 = vmatmul.mubr.f32.gmra.mrb[0].mxu0 %v51
    %v119 = vpop.f32.mrb[0].mxu0
    %v120 = vadd.f32 0.0, %v119
    %v121 = vpop.f32.mrb[0].mxu0
    %v122 = vadd.f32 0.0, %v121
    %123 = vdwg.mxu0
    %v124 = vtanh.pop %v120
    %vm125 = vcmask 31744
    %v126 = vsel %vm125, %v122, -inf
    %127 = vmax.xlane.f32.xlu0 %v126
    %v128 = vpop.xlane.xlu0 %127
    %v129 = vsub.f32 %v122, %v128
    %v130 = vmul.f32 %v129, 1.442695
    %v131 = vpow.pop %v130
    %v132 = vsel %vm125, %v131, 0.0
    %133 = vadd.xlane.f32.xlu0 %v132
    %v134 = vpop.xlane.xlu0 %133
    %v135 = vrcp.pop %v134
    %v136 = vmul.f32 %v131, %v135
    %v137 = vld [vmem:[%s2] sm:$0xff]
    %v138 = vld [vmem:[%s2 + $0x8] sm:$0xff]
    %v139 = vld [vmem:[%s2 + $0x10] sm:$0xff]
    %v140 = vld [vmem:[%s2 + $0x18] sm:$0xff]
    %v141 = vld [vmem:[%s2 + $0x20] sm:$0xff]
    %v142 = vld [vmem:[%s2 + $0x28] sm:$0xff]
    %v143 = vld [vmem:[%s2 + $0x30] sm:$0xff]
    %v144 = vld [vmem:[%s2 + $0x38] sm:$0xff]
    %v145 = vld [vmem:[%s2 + $0x40] sm:$0xff]
    %v146 = vld [vmem:[%s2 + $0x48] sm:$0xff]
    %v147 = vld [vmem:[%s2 + $0x50] sm:$0xff]
    %v148 = vld [vmem:[%s2 + $0x58] sm:$0xff]
    %v149 = vld [vmem:[%s2 + $0x60] sm:$0xff]
    %v150 = vld [vmem:[%s2 + $0x68] sm:$0xff]
    %v151 = vld [vmem:[%s2 + $0x70] sm:$0xff]
    %v152 = vld [vmem:[%s2 + $0x78] sm:$0xff]
    %153 = vmatprep.subr.mxu0 0.0
    %154 = vmatpush1.msra.mxu0 %v137
    %155 = vmatprep.subr.mxu0 0.0
    %156 = vmatpush1.msra.mxu0 %v138
    %157 = vmatprep.subr.mxu0 0.0
    %158 = vmatpush1.msra.mxu0 %v139
    %159 = vmatprep.subr.mxu0 0.0
    %160 = vmatpush1.msra.mxu0 %v140
    %161 = vmatprep.subr.mxu0 0.0
    %162 = vmatpush1.msra.mxu0 %v141
    %163 = vmatprep.subr.mxu0 0.0
    %164 = vmatpush1.msra.mxu0 %v142
    %165 = vmatprep.subr.mxu0 0.0
    %166 = vmatpush1.msra.mxu0 %v143
    %167 = vmatprep.subr.mxu0 0.0
    %168 = vmatpush1.msra.mxu0 %v144
    %169 = vmatprep.subr.mxu0 0.0
    %170 = vmatpush1.msra.mxu0 %v145
    %171 = vmatprep.subr.mxu0 0.0
    %172 = vmatpush1.msra.mxu0 %v146
    %173 = vmatprep.subr.mxu0 0.0
    %174 = vmatpush1.msra.mxu0 %v147
    %175 = vmatprep.subr.mxu0 0.0
    %176 = vmatpush1.msra.mxu0 %v148
    %177 = vmatprep.subr.mxu0 0.0
    %178 = vmatpush1.msra.mxu0 %v149
    %179 = vmatprep.subr.mxu0 0.0
    %180 = vmatpush1.msra.mxu0 %v150
    %181 = vmatprep.subr.mxu0 0.0
    %182 = vmatpush1.msra.mxu0 %v151
    %183 = vmatprep.subr.mxu0 0.0
    %184 = vmatpush1.msra.mxu0 %v152
    %185 = vmatprep.subr.mxu0 0.0
    %186 = vmatpush1.msra.mxu0 0.0
    %187 = vmatprep.subr.mxu0 0.0
    %188 = vmatpush1.msra.mxu0 0.0
    %189 = vmatprep.subr.mxu0 0.0
    %190 = vmatpush1.msra.mxu0 0.0
    %191 = vmatprep.subr.mxu0 0.0
    %192 = vmatpush1.msra.mxu0 0.0
    %193 = vmatprep.subr.mxu0 0.0
    %194 = vmatpush1.msra.mxu0 0.0
    %195 = vmatprep.subr.mxu0 0.0
    %196 = vmatpush1.msra.mxu0 0.0
    %197 = vmatprep.subr.mxu0 0.0
    %198 = vmatpush1.msra.mxu0 0.0
    %199 = vmatprep.subr.mxu0 0.0
    %200 = vmatpush1.msra.mxu0 0.0
    %201 = vmatprep.subr.mxu0 0.0
    %202 = vmatpush1.msra.mxu0 0.0
    %203 = vmatprep.subr.mxu0 0.0
    %204 = vmatpush1.msra.mxu0 0.0
    %205 = vmatprep.subr.mxu0 0.0
    %206 = vmatpush1.msra.mxu0 0.0
    %207 = vmatprep.subr.mxu0 0.0
    %208 = vmatpush1.msra.mxu0 0.0
    %209 = vmatprep.subr.mxu0 0.0
    %210 = vmatpush1.msra.mxu0 0.0
    %211 = vmatprep.subr.mxu0 0.0
    %212 = vmatpush1.msra.mxu0 0.0
    %213 = vmatprep.subr.mxu0 0.0
    %214 = vmatpush1.msra.mxu0 0.0
    %215 = vmatprep.subr.mxu0 0.0
    %216 = vmatpush1.msra.mxu0 0.0
    %217 = vmatprep.mubr.f32.mxu0 0.0
    %218 = vmatmul.mubr.f32.gmra.mrb[0].mxu0 %v124
    %v219 = vpop.f32.mrb[0].mxu0
    %v220 = vadd.f32 0.0, %v219
    %v221 = vpop.f32.mrb[0].mxu0
    %222 = vdwg.mxu0
    %v223 = vtanh.pop %v220
    %v225 = vsel %vm125, %v136, 0
    %vm227 = vcmask 1043456
    %v229 = vsel %vm227, %v39, 0
    %231 = vmatprep.subr.mxu0 0.0
    %232 = vmatpush1.msra.mxu0 %v229
    %233 = vmatprep.subr.mxu0 0.0
    %234 = vmatpush1.msra.mxu0 0.0
    %235 = vmatprep.subr.mxu0 0.0
    %236 = vmatpush1.msra.mxu0 0.0
    %237 = vmatprep.subr.mxu0 0.0
    %238 = vmatpush1.msra.mxu0 0.0
    %239 = vmatprep.subr.mxu0 0.0
    %240 = vmatpush1.msra.mxu0 0.0
    %241 = vmatprep.subr.mxu0 0.0
    %242 = vmatpush1.msra.mxu0 0.0
    %243 = vmatprep.subr.mxu0 0.0
    %244 = vmatpush1.msra.mxu0 0.0
    %245 = vmatprep.subr.mxu0 0.0
    %246 = vmatpush1.msra.mxu0 0.0
    %247 = vmatprep.subr.mxu0 0.0
    %248 = vmatpush1.msra.mxu0 0.0
    %249 = vmatprep.subr.mxu0 0.0
    %250 = vmatpush1.msra.mxu0 0.0
    %251 = vmatprep.subr.mxu0 0.0
    %252 = vmatpush1.msra.mxu0 0.0
    %253 = vmatprep.subr.mxu0 0.0
    %254 = vmatpush1.msra.mxu0 0.0
    %255 = vmatprep.subr.mxu0 0.0
    %256 = vmatpush1.msra.mxu0 0.0
    %257 = vmatprep.subr.mxu0 0.0
    %258 = vmatpush1.msra.mxu0 0.0
    %259 = vmatprep.subr.mxu0 0.0
    %260 = vmatpush1.msra.mxu0 0.0
    %261 = vmatprep.subr.mxu0 0.0
    %262 = vmatpush1.msra.mxu0 0.0
    %263 = vmatprep.subr.mxu0 0.0
    %264 = vmatpush1.msra.mxu0 0.0
    %265 = vmatprep.subr.mxu0 0.0
    %266 = vmatpush1.msra.mxu0 0.0
    %267 = vmatprep.subr.mxu0 0.0
    %268 = vmatpush1.msra.mxu0 0.0
    %269 = vmatprep.subr.mxu0 0.0
    %270 = vmatpush1.msra.mxu0 0.0
    %271 = vmatprep.subr.mxu0 0.0
    %272 = vmatpush1.msra.mxu0 0.0
    %273 = vmatprep.subr.mxu0 0.0
    %274 = vmatpush1.msra.mxu0 0.0
    %275 = vmatprep.subr.mxu0 0.0
    %276 = vmatpush1.msra.mxu0 0.0
    %277 = vmatprep.subr.mxu0 0.0
    %278 = vmatpush1.msra.mxu0 0.0
    %279 = vmatprep.subr.mxu0 0.0
    %280 = vmatpush1.msra.mxu0 0.0
    %281 = vmatprep.subr.mxu0 0.0
    %282 = vmatpush1.msra.mxu0 0.0
    %283 = vmatprep.subr.mxu0 0.0
    %284 = vmatpush1.msra.mxu0 0.0
    %285 = vmatprep.subr.mxu0 0.0
    %286 = vmatpush1.msra.mxu0 0.0
    %287 = vmatprep.subr.mxu0 0.0
    %288 = vmatpush1.msra.mxu0 0.0
    %289 = vmatprep.subr.mxu0 0.0
    %290 = vmatpush1.msra.mxu0 0.0
    %291 = vmatprep.subr.mxu0 0.0
    %292 = vmatpush1.msra.mxu0 0.0
    %293 = vmatprep.subr.mxu0 0.0
    %294 = vmatpush1.msra.mxu0 0.0
    %295 = vmatprep.mubr.f32.mxu0 0.0
    %296 = vmatmul.mubr.f32.gmra.mrb[0].mxu0 %v225
    %v297 = vpop.f32.mrb[0].mxu0
    %v298 = vadd.f32 0.0, %v297
    %v299 = vpop.f32.mrb[0].mxu0
    %300 = vdwg.mxu0
    %v301 = vmul.f32 %v223, %v298
    %v302 = vld [vmem:[%s3] sm:$0xff]
    %v303 = vld [vmem:[%s3 + $0x8] sm:$0xff]
    %v304 = vld [vmem:[%s3 + $0x10] sm:$0xff]
    %v305 = vld [vmem:[%s3 + $0x18] sm:$0xff]
    %v306 = vld [vmem:[%s3 + $0x20] sm:$0xff]
    %v307 = vld [vmem:[%s3 + $0x28] sm:$0xff]
    %v308 = vld [vmem:[%s3 + $0x30] sm:$0xff]
    %v309 = vld [vmem:[%s3 + $0x38] sm:$0xff]
    %v310 = vld [vmem:[%s3 + $0x40] sm:$0xff]
    %v311 = vld [vmem:[%s3 + $0x48] sm:$0xff]
    %v312 = vld [vmem:[%s3 + $0x50] sm:$0xff]
    %v313 = vld [vmem:[%s3 + $0x58] sm:$0xff]
    %v314 = vld [vmem:[%s3 + $0x60] sm:$0xff]
    %v315 = vld [vmem:[%s3 + $0x68] sm:$0xff]
    %v316 = vld [vmem:[%s3 + $0x70] sm:$0xff]
    %v317 = vld [vmem:[%s3 + $0x78] sm:$0xff]
    %v318 = vlaneseq
    %v319 = vshrl.u32 %v318, 7
    %v320 = vsub.s32 0, %v319
    %v321 = vrot.slane %v40, %v320
    %322 = vmatprep.subr.mxu0 0.0
    %323 = vmatpush1.msra.mxu0 %v302
    %324 = vmatprep.subr.mxu0 0.0
    %325 = vmatpush1.msra.mxu0 %v303
    %326 = vmatprep.subr.mxu0 0.0
    %327 = vmatpush1.msra.mxu0 %v304
    %328 = vmatprep.subr.mxu0 0.0
    %329 = vmatpush1.msra.mxu0 %v305
    %330 = vmatprep.subr.mxu0 0.0
    %331 = vmatpush1.msra.mxu0 %v306
    %332 = vmatprep.subr.mxu0 0.0
    %333 = vmatpush1.msra.mxu0 %v307
    %334 = vmatprep.subr.mxu0 0.0
    %335 = vmatpush1.msra.mxu0 %v308
    %336 = vmatprep.subr.mxu0 0.0
    %337 = vmatpush1.msra.mxu0 %v309
    %338 = vmatprep.subr.mxu0 0.0
    %339 = vmatpush1.msra.mxu0 %v310
    %340 = vmatprep.subr.mxu0 0.0
    %341 = vmatpush1.msra.mxu0 %v311
    %342 = vmatprep.subr.mxu0 0.0
    %343 = vmatpush1.msra.mxu0 %v312
    %344 = vmatprep.subr.mxu0 0.0
    %345 = vmatpush1.msra.mxu0 %v313
    %346 = vmatprep.subr.mxu0 0.0
    %347 = vmatpush1.msra.mxu0 %v314
    %348 = vmatprep.subr.mxu0 0.0
    %349 = vmatpush1.msra.mxu0 %v315
    %350 = vmatprep.subr.mxu0 0.0
    %351 = vmatpush1.msra.mxu0 %v316
    %352 = vmatprep.subr.mxu0 0.0
    %353 = vmatpush1.msra.mxu0 %v317
    %354 = vmatprep.subr.mxu0 0.0
    %355 = vmatpush1.msra.mxu0 0.0
    %356 = vmatprep.subr.mxu0 0.0
    %357 = vmatpush1.msra.mxu0 0.0
    %358 = vmatprep.subr.mxu0 0.0
    %359 = vmatpush1.msra.mxu0 0.0
    %360 = vmatprep.subr.mxu0 0.0
    %361 = vmatpush1.msra.mxu0 0.0
    %362 = vmatprep.subr.mxu0 0.0
    %363 = vmatpush1.msra.mxu0 0.0
    %364 = vmatprep.subr.mxu0 0.0
    %365 = vmatpush1.msra.mxu0 0.0
    %366 = vmatprep.subr.mxu0 0.0
    %367 = vmatpush1.msra.mxu0 0.0
    %368 = vmatprep.subr.mxu0 0.0
    %369 = vmatpush1.msra.mxu0 0.0
    %370 = vmatprep.subr.mxu0 0.0
    %371 = vmatpush1.msra.mxu0 0.0
    %372 = vmatprep.subr.mxu0 0.0
    %373 = vmatpush1.msra.mxu0 0.0
    %374 = vmatprep.subr.mxu0 0.0
    %375 = vmatpush1.msra.mxu0 0.0
    %376 = vmatprep.subr.mxu0 0.0
    %377 = vmatpush1.msra.mxu0 0.0
    %378 = vmatprep.subr.mxu0 0.0
    %379 = vmatpush1.msra.mxu0 0.0
    %380 = vmatprep.subr.mxu0 0.0
    %381 = vmatpush1.msra.mxu0 0.0
    %382 = vmatprep.subr.mxu0 0.0
    %383 = vmatpush1.msra.mxu0 0.0
    %384 = vmatprep.subr.mxu0 0.0
    %385 = vmatpush1.msra.mxu0 0.0
    %386 = vmatprep.mubr.f32.mxu0 0.0
    %387 = vmatmul.mubr.f32.gmra.mrb[0].mxu0 %v301
    %v388 = vpop.f32.mrb[0].mxu0
    %v389 = vadd.f32 %v321, %v388
    %v390 = vpop.f32.mrb[0].mxu0
    %391 = vdwg.mxu0
    %v392 = vmul.f32 %v38, %v389
    %v393 = vadd.f32 %v392, %v38
    %v394 = vld [vmem:[%s5 + $0x1] sm:$0x1]
    %s395 = scalar_lea.vmem [#allocation2], 64
    %v396 = vld [vmem:[%s395] sm:$0xff]
    %v397 = vld [vmem:[%s395 + $0x8] sm:$0xff]
    %v398 = vld [vmem:[%s395 + $0x10] sm:$0xff]
    %v399 = vld [vmem:[%s395 + $0x18] sm:$0xff]
    %v400 = vld [vmem:[%s395 + $0x20] sm:$0xff]
    %v401 = vld [vmem:[%s395 + $0x28] sm:$0xff]
    %v402 = vld [vmem:[%s395 + $0x30] sm:$0xff]
    %v403 = vld [vmem:[%s395 + $0x38] sm:$0xff]
    %v405 = vsel %vm49, %v393, 0
    %407 = vmatprep.subr.mxu0 %v397
    %408 = vmatpush1.msra.mxu0 %v396
    %409 = vmatprep.subr.mxu0 %v399
    %410 = vmatpush1.msra.mxu0 %v398
    %411 = vmatprep.subr.mxu0 %v401
    %412 = vmatpush1.msra.mxu0 %v400
    %413 = vmatprep.subr.mxu0 %v403
    %414 = vmatpush1.msra.mxu0 %v402
    %415 = vmatprep.subr.mxu0 0.0
    %416 = vmatpush1.msra.mxu0 0.0
    %417 = vmatprep.subr.mxu0 0.0
    %418 = vmatpush1.msra.mxu0 0.0
    %419 = vmatprep.subr.mxu0 0.0
    %420 = vmatpush1.msra.mxu0 0.0
    %421 = vmatprep.subr.mxu0 0.0
    %422 = vmatpush1.msra.mxu0 0.0
    %423 = vmatprep.subr.mxu0 0.0
    %424 = vmatpush1.msra.mxu0 0.0
    %425 = vmatprep.subr.mxu0 0.0
    %426 = vmatpush1.msra.mxu0 0.0
    %427 = vmatprep.subr.mxu0 0.0
    %428 = vmatpush1.msra.mxu0 0.0
    %429 = vmatprep.subr.mxu0 0.0
    %430 = vmatpush1.msra.mxu0 0.0
    %431 = vmatprep.subr.mxu0 0.0
    %432 = vmatpush1.msra.mxu0 0.0
    %433 = vmatprep.subr.mxu0 0.0
    %434 = vmatpush1.msra.mxu0 0.0
    %435 = vmatprep.subr.mxu0 0.0
    %436 = vmatpush1.msra.mxu0 0.0
    %437 = vmatprep.subr.mxu0 0.0
    %438 = vmatpush1.msra.mxu0 0.0
    %439 = vmatprep.subr.mxu0 0.0
    %440 = vmatpush1.msra.mxu0 0.0
    %441 = vmatprep.subr.mxu0 0.0
    %442 = vmatpush1.msra.mxu0 0.0
    %443 = vmatprep.subr.mxu0 0.0
    %444 = vmatpush1.msra.mxu0 0.0
    %445 = vmatprep.subr.mxu0 0.0
    %446 = vmatpush1.msra.mxu0 0.0
    %447 = vmatprep.subr.mxu0 0.0
    %448 = vmatpush1.msra.mxu0 0.0
    %449 = vmatprep.subr.mxu0 0.0
    %450 = vmatpush1.msra.mxu0 0.0
    %451 = vmatprep.subr.mxu0 0.0
    %452 = vmatpush1.msra.mxu0 0.0
    %453 = vmatprep.subr.mxu0 0.0
    %454 = vmatpush1.msra.mxu0 0.0
    %455 = vmatprep.subr.mxu0 0.0
    %456 = vmatpush1.msra.mxu0 0.0
    %457 = vmatprep.subr.mxu0 0.0
    %458 = vmatpush1.msra.mxu0 0.0
    %459 = vmatprep.subr.mxu0 0.0
    %460 = vmatpush1.msra.mxu0 0.0
    %461 = vmatprep.subr.mxu0 0.0
    %462 = vmatpush1.msra.mxu0 0.0
    %463 = vmatprep.subr.mxu0 0.0
    %464 = vmatpush1.msra.mxu0 0.0
    %465 = vmatprep.subr.mxu0 0.0
    %466 = vmatpush1.msra.mxu0 0.0
    %467 = vmatprep.subr.mxu0 0.0
    %468 = vmatpush1.msra.mxu0 0.0
    %469 = vmatprep.subr.mxu0 0.0
    %470 = vmatpush1.msra.mxu0 0.0
    %471 = vmatprep.mubr.f32.mxu0 0.0
    %472 = vmatmul.mubr.f32.gmra.mrb[0].mxu0 %v405
    %v473 = vpop.f32.mrb[0].mxu0
    %v474 = vadd.f32 0.0, %v473
    %v475 = vpop.f32.mrb[0].mxu0
    %v476 = vadd.f32 0.0, %v475
    %477 = vdwg.mxu0
    %v478 = vtanh.pop %v474
    %v479 = vsel %vm125, %v476, -inf
    %480 = vmax.xlane.f32.xlu0 %v479
    %v481 = vpop.xlane.xlu0 %480
    %v482 = vsub.f32 %v476, %v481
    %v483 = vmul.f32 %v482, 1.442695
    %v484 = vpow.pop %v483
    %v485 = vsel %vm125, %v484, 0.0
    %486 = vadd.xlane.f32.xlu0 %v485
    %v487 = vpop.xlane.xlu0 %486
    %v488 = vrcp.pop %v487
    %v489 = vmul.f32 %v484, %v488
    %s490 = scalar_lea.vmem %s2, 128
    %v491 = vld [vmem:[%s490] sm:$0xff]
    %v492 = vld [vmem:[%s490 + $0x8] sm:$0xff]
    %v493 = vld [vmem:[%s490 + $0x10] sm:$0xff]
    %v494 = vld [vmem:[%s490 + $0x18] sm:$0xff]
    %v495 = vld [vmem:[%s490 + $0x20] sm:$0xff]
    %v496 = vld [vmem:[%s490 + $0x28] sm:$0xff]
    %v497 = vld [vmem:[%s490 + $0x30] sm:$0xff]
    %v498 = vld [vmem:[%s490 + $0x38] sm:$0xff]
    %v499 = vld [vmem:[%s490 + $0x40] sm:$0xff]
    %v500 = vld [vmem:[%s490 + $0x48] sm:$0xff]
    %v501 = vld [vmem:[%s490 + $0x50] sm:$0xff]
    %v502 = vld [vmem:[%s490 + $0x58] sm:$0xff]
    %v503 = vld [vmem:[%s490 + $0x60] sm:$0xff]
    %v504 = vld [vmem:[%s490 + $0x68] sm:$0xff]
    %v505 = vld [vmem:[%s490 + $0x70] sm:$0xff]
    %v506 = vld [vmem:[%s490 + $0x78] sm:$0xff]
    %507 = vmatprep.subr.mxu0 0.0
    %508 = vmatpush1.msra.mxu0 %v491
    %509 = vmatprep.subr.mxu0 0.0
    %510 = vmatpush1.msra.mxu0 %v492
    %511 = vmatprep.subr.mxu0 0.0
    %512 = vmatpush1.msra.mxu0 %v493
    %513 = vmatprep.subr.mxu0 0.0
    %514 = vmatpush1.msra.mxu0 %v494
    %515 = vmatprep.subr.mxu0 0.0
    %516 = vmatpush1.msra.mxu0 %v495
    %517 = vmatprep.subr.mxu0 0.0
    %518 = vmatpush1.msra.mxu0 %v496
    %519 = vmatprep.subr.mxu0 0.0
    %520 = vmatpush1.msra.mxu0 %v497
    %521 = vmatprep.subr.mxu0 0.0
    %522 = vmatpush1.msra.mxu0 %v498
    %523 = vmatprep.subr.mxu0 0.0
    %524 = vmatpush1.msra.mxu0 %v499
    %525 = vmatprep.subr.mxu0 0.0
    %526 = vmatpush1.msra.mxu0 %v500
    %527 = vmatprep.subr.mxu0 0.0
    %528 = vmatpush1.msra.mxu0 %v501
    %529 = vmatprep.subr.mxu0 0.0
    %530 = vmatpush1.msra.mxu0 %v502
    %531 = vmatprep.subr.mxu0 0.0
    %532 = vmatpush1.msra.mxu0 %v503
    %533 = vmatprep.subr.mxu0 0.0
    %534 = vmatpush1.msra.mxu0 %v504
    %535 = vmatprep.subr.mxu0 0.0
    %536 = vmatpush1.msra.mxu0 %v505
    %537 = vmatprep.subr.mxu0 0.0
    %538 = vmatpush1.msra.mxu0 %v506
    %539 = vmatprep.subr.mxu0 0.0
    %540 = vmatpush1.msra.mxu0 0.0
    %541 = vmatprep.subr.mxu0 0.0
    %542 = vmatpush1.msra.mxu0 0.0
    %543 = vmatprep.subr.mxu0 0.0
    %544 = vmatpush1.msra.mxu0 0.0
    %545 = vmatprep.subr.mxu0 0.0
    %546 = vmatpush1.msra.mxu0 0.0
    %547 = vmatprep.subr.mxu0 0.0
    %548 = vmatpush1.msra.mxu0 0.0
    %549 = vmatprep.subr.mxu0 0.0
    %550 = vmatpush1.msra.mxu0 0.0
    %551 = vmatprep.subr.mxu0 0.0
    %552 = vmatpush1.msra.mxu0 0.0
    %553 = vmatprep.subr.mxu0 0.0
    %554 = vmatpush1.msra.mxu0 0.0
    %555 = vmatprep.subr.mxu0 0.0
    %556 = vmatpush1.msra.mxu0 0.0
    %557 = vmatprep.subr.mxu0 0.0
    %558 = vmatpush1.msra.mxu0 0.0
    %559 = vmatprep.subr.mxu0 0.0
    %560 = vmatpush1.msra.mxu0 0.0
    %561 = vmatprep.subr.mxu0 0.0
    %562 = vmatpush1.msra.mxu0 0.0
    %563 = vmatprep.subr.mxu0 0.0
    %564 = vmatpush1.msra.mxu0 0.0
    %565 = vmatprep.subr.mxu0 0.0
    %566 = vmatpush1.msra.mxu0 0.0
    %567 = vmatprep.subr.mxu0 0.0
    %568 = vmatpush1.msra.mxu0 0.0
    %569 = vmatprep.subr.mxu0 0.0
    %570 = vmatpush1.msra.mxu0 0.0
    %571 = vmatprep.mubr.f32.mxu0 0.0
    %572 = vmatmul.mubr.f32.gmra.mrb[0].mxu0 %v478
    %v573 = vpop.f32.mrb[0].mxu0
    %v574 = vadd.f32 0.0, %v573
    %v575 = vpop.f32.mrb[0].mxu0
    %576 = vdwg.mxu0
    %v577 = vtanh.pop %v574
    %v579 = vsel %vm125, %v489, 0
    %581 = vmatprep.subr.mxu0 0.0
    %582 = vmatpush1.msra.mxu0 %v229
    %583 = vmatprep.subr.mxu0 0.0
    %584 = vmatpush1.msra.mxu0 0.0
    %585 = vmatprep.subr.mxu0 0.0
    %586 = vmatpush1.msra.mxu0 0.0
    %587 = vmatprep.subr.mxu0 0.0
    %588 = vmatpush1.msra.mxu0 0.0
    %589 = vmatprep.subr.mxu0 0.0
    %590 = vmatpush1.msra.mxu0 0.0
    %591 = vmatprep.subr.mxu0 0.0
    %592 = vmatpush1.msra.mxu0 0.0
    %593 = vmatprep.subr.mxu0 0.0
    %594 = vmatpush1.msra.mxu0 0.0
    %595 = vmatprep.subr.mxu0 0.0
    %596 = vmatpush1.msra.mxu0 0.0
    %597 = vmatprep.subr.mxu0 0.0
    %598 = vmatpush1.msra.mxu0 0.0
    %599 = vmatprep.subr.mxu0 0.0
    %600 = vmatpush1.msra.mxu0 0.0
    %601 = vmatprep.subr.mxu0 0.0
    %602 = vmatpush1.msra.mxu0 0.0
    %603 = vmatprep.subr.mxu0 0.0
    %604 = vmatpush1.msra.mxu0 0.0
    %605 = vmatprep.subr.mxu0 0.0
    %606 = vmatpush1.msra.mxu0 0.0
    %607 = vmatprep.subr.mxu0 0.0
    %608 = vmatpush1.msra.mxu0 0.0
    %609 = vmatprep.subr.mxu0 0.0
    %610 = vmatpush1.msra.mxu0 0.0
    %611 = vmatprep.subr.mxu0 0.0
    %612 = vmatpush1.msra.mxu0 0.0
    %613 = vmatprep.subr.mxu0 0.0
    %614 = vmatpush1.msra.mxu0 0.0
    %615 = vmatprep.subr.mxu0 0.0
    %616 = vmatpush1.msra.mxu0 0.0
    %617 = vmatprep.subr.mxu0 0.0
    %618 = vmatpush1.msra.mxu0 0.0
    %619 = vmatprep.subr.mxu0 0.0
    %620 = vmatpush1.msra.mxu0 0.0
    %621 = vmatprep.subr.mxu0 0.0
    %622 = vmatpush1.msra.mxu0 0.0
    %623 = vmatprep.subr.mxu0 0.0
    %624 = vmatpush1.msra.mxu0 0.0
    %625 = vmatprep.subr.mxu0 0.0
    %626 = vmatpush1.msra.mxu0 0.0
    %627 = vmatprep.subr.mxu0 0.0
    %628 = vmatpush1.msra.mxu0 0.0
    %629 = vmatprep.subr.mxu0 0.0
    %630 = vmatpush1.msra.mxu0 0.0
    %631 = vmatprep.subr.mxu0 0.0
    %632 = vmatpush1.msra.mxu0 0.0
    %633 = vmatprep.subr.mxu0 0.0
    %634 = vmatpush1.msra.mxu0 0.0
    %635 = vmatprep.subr.mxu0 0.0
    %636 = vmatpush1.msra.mxu0 0.0
    %637 = vmatprep.subr.mxu0 0.0
    %638 = vmatpush1.msra.mxu0 0.0
    %639 = vmatprep.subr.mxu0 0.0
    %640 = vmatpush1.msra.mxu0 0.0
    %641 = vmatprep.subr.mxu0 0.0
    %642 = vmatpush1.msra.mxu0 0.0
    %643 = vmatprep.subr.mxu0 0.0
    %644 = vmatpush1.msra.mxu0 0.0
    %645 = vmatprep.mubr.f32.mxu0 0.0
    %646 = vmatmul.mubr.f32.gmra.mrb[0].mxu0 %v579
    %v647 = vpop.f32.mrb[0].mxu0
    %v648 = vadd.f32 0.0, %v647
    %v649 = vpop.f32.mrb[0].mxu0
    %650 = vdwg.mxu0
    %v651 = vmul.f32 %v577, %v648
    %s652 = scalar_lea.vmem %s3, 128
    %v653 = vld [vmem:[%s652] sm:$0xff]
    %v654 = vld [vmem:[%s652 + $0x8] sm:$0xff]
    %v655 = vld [vmem:[%s652 + $0x10] sm:$0xff]
    %v656 = vld [vmem:[%s652 + $0x18] sm:$0xff]
    %v657 = vld [vmem:[%s652 + $0x20] sm:$0xff]
    %v658 = vld [vmem:[%s652 + $0x28] sm:$0xff]
    %v659 = vld [vmem:[%s652 + $0x30] sm:$0xff]
    %v660 = vld [vmem:[%s652 + $0x38] sm:$0xff]
    %v661 = vld [vmem:[%s652 + $0x40] sm:$0xff]
    %v662 = vld [vmem:[%s652 + $0x48] sm:$0xff]
    %v663 = vld [vmem:[%s652 + $0x50] sm:$0xff]
    %v664 = vld [vmem:[%s652 + $0x58] sm:$0xff]
    %v665 = vld [vmem:[%s652 + $0x60] sm:$0xff]
    %v666 = vld [vmem:[%s652 + $0x68] sm:$0xff]
    %v667 = vld [vmem:[%s652 + $0x70] sm:$0xff]
    %v668 = vld [vmem:[%s652 + $0x78] sm:$0xff]
    %v669 = vlaneseq
    %v670 = vshrl.u32 %v669, 7
    %v671 = vsub.s32 0, %v670
    %v672 = vrot.slane %v394, %v671
    %673 = vmatprep.subr.mxu0 0.0
    %674 = vmatpush1.msra.mxu0 %v653
    %675 = vmatprep.subr.mxu0 0.0
    %676 = vmatpush1.msra.mxu0 %v654
    %677 = vmatprep.subr.mxu0 0.0
    %678 = vmatpush1.msra.mxu0 %v655
    %679 = vmatprep.subr.mxu0 0.0
    %680 = vmatpush1.msra.mxu0 %v656
    %681 = vmatprep.subr.mxu0 0.0
    %682 = vmatpush1.msra.mxu0 %v657
    %683 = vmatprep.subr.mxu0 0.0
    %684 = vmatpush1.msra.mxu0 %v658
    %685 = vmatprep.subr.mxu0 0.0
    %686 = vmatpush1.msra.mxu0 %v659
    %687 = vmatprep.subr.mxu0 0.0
    %688 = vmatpush1.msra.mxu0 %v660
    %689 = vmatprep.subr.mxu0 0.0
    %690 = vmatpush1.msra.mxu0 %v661
    %691 = vmatprep.subr.mxu0 0.0
    %692 = vmatpush1.msra.mxu0 %v662
    %693 = vmatprep.subr.mxu0 0.0
    %694 = vmatpush1.msra.mxu0 %v663
    %695 = vmatprep.subr.mxu0 0.0
    %696 = vmatpush1.msra.mxu0 %v664
    %697 = vmatprep.subr.mxu0 0.0
    %698 = vmatpush1.msra.mxu0 %v665
    %699 = vmatprep.subr.mxu0 0.0
    %700 = vmatpush1.msra.mxu0 %v666
    %701 = vmatprep.subr.mxu0 0.0
    %702 = vmatpush1.msra.mxu0 %v667
    %703 = vmatprep.subr.mxu0 0.0
    %704 = vmatpush1.msra.mxu0 %v668
    %705 = vmatprep.subr.mxu0 0.0
    %706 = vmatpush1.msra.mxu0 0.0
    %707 = vmatprep.subr.mxu0 0.0
    %708 = vmatpush1.msra.mxu0 0.0
    %709 = vmatprep.subr.mxu0 0.0
    %710 = vmatpush1.msra.mxu0 0.0
    %711 = vmatprep.subr.mxu0 0.0
    %712 = vmatpush1.msra.mxu0 0.0
    %713 = vmatprep.subr.mxu0 0.0
    %714 = vmatpush1.msra.mxu0 0.0
    %715 = vmatprep.subr.mxu0 0.0
    %716 = vmatpush1.msra.mxu0 0.0
    %717 = vmatprep.subr.mxu0 0.0
    %718 = vmatpush1.msra.mxu0 0.0
    %719 = vmatprep.subr.mxu0 0.0
    %720 = vmatpush1.msra.mxu0 0.0
    %721 = vmatprep.subr.mxu0 0.0
    %722 = vmatpush1.msra.mxu0 0.0
    %723 = vmatprep.subr.mxu0 0.0
    %724 = vmatpush1.msra.mxu0 0.0
    %725 = vmatprep.subr.mxu0 0.0
    %726 = vmatpush1.msra.mxu0 0.0
    %727 = vmatprep.subr.mxu0 0.0
    %728 = vmatpush1.msra.mxu0 0.0
    %729 = vmatprep.subr.mxu0 0.0
    %730 = vmatpush1.msra.mxu0 0.0
    %731 = vmatprep.subr.mxu0 0.0
    %732 = vmatpush1.msra.mxu0 0.0
    %733 = vmatprep.subr.mxu0 0.0
    %734 = vmatpush1.msra.mxu0 0.0
    %735 = vmatprep.subr.mxu0 0.0
    %736 = vmatpush1.msra.mxu0 0.0
    %737 = vmatprep.mubr.f32.mxu0 0.0
    %738 = vmatmul.mubr.f32.gmra.mrb[0].mxu0 %v651
    %v739 = vpop.f32.mrb[0].mxu0
    %v740 = vadd.f32 %v672, %v739
    %v741 = vpop.f32.mrb[0].mxu0
    %742 = vdwg.mxu0
    %v743 = vmul.f32 %v38, %v740
    %v744 = vadd.f32 %v743, %v393
    %745 = vst.msk [vmem:[#allocation5] sm:$0xff] %vm49, %v744
    // Predicated region
    $region30: #{tpu_custom_call.1} parent=1 // pred_check
      _
    $region31: #{tpu_custom_call.1} parent=1 // pred_check_branch
      %747 = sbr.rel (0) target = $region33
    $region32: #{tpu_custom_call.1} parent=1 // pred_region
      %s749 = ssub.s32 128, 128
      %750 = vsyncadd [#allocation4], %s749
      %s752 = sshll.u32 [#allocation5], 4
      %s753 = int_to_ptr.vmem [resolvable:$true] %s752
      %755 = dma.vmem_to_hbm [thread:$0]  %s753, 128, %s6, [#allocation4]
    $region33: #{tpu_custom_call.1} parent=1 // pred_fallthru
      _
    // Predicated region
    $region34: #{tpu_custom_call.1} parent=1 // pred_check
      _
    $region35: #{tpu_custom_call.1} parent=1 // pred_check_branch
      %757 = sbr.rel (0) target = $region37
    $region36: #{tpu_custom_call.1} parent=1 // pred_region
      %758 = dma.done [#allocation4], 128
    $region37: #{tpu_custom_call.1} parent=1 // pred_fallthru
      _
    %759 = vsyncpa [#allocation3], 1
    %760 = vsyncpa [#allocation4], 1

// kernel: tpu_custom_call.1
$region0: #{tpu_custom_call.1}
  #allocation0 [shape = 'u32[]', space=smem, size = 0x4, offset = 0x4, fixed_abs, tag = 'smem constant byte address 0x4 - core index']
  #allocation1 [shape = 'u32[144,128]{1,0:T(1,128)}', space=vmem, size = 0x12000, scoped, tag = 'internal scratch']
  %s0 = inlined_call_operand.vmem [shape: f32[8,32], index: 0, kind: input, shape index: {}]
  %s1 = inlined_call_operand.hbm [shape: f32[2,32,256], index: 1, kind: input, shape index: {}]
  %s2 = inlined_call_operand.vmem [shape: f32[2,128,128], index: 2, kind: input, shape index: {}]
  %s3 = inlined_call_operand.vmem [shape: f32[2,128,32], index: 3, kind: input, shape index: {}]
  %s4 = inlined_call_operand.vmem [shape: f32[4,128], index: 4, kind: input, shape index: {}]
  %s5 = inlined_call_operand.vmem [shape: f32[2,32], index: 5, kind: input, shape index: {}]
  %s6 = inlined_call_operand.hbm [shape: f32[8,32], index: 6, kind: output, shape index: {}]
  %s7 = sld [smem:[#allocation0]]
  $region38: #{tpu_custom_call.1} parent=0
    _
  %s9 = ssub.s32 1, %s7
  %s10 = scalar_select 0, %s9, %s7
  $region1: #{tpu_custom_call.1} parent=0
    #allocation2 [shape = 'u8[65536]{0}', space=vmem, size = 0x10000, scoped, tag = 'input window, operand 1, single buffered']
    #allocation3 [shape = 's32[1]{0}', space=sflag, size = 0x4, scoped, tag = 'scoped memory for tpu_custom_call.1']
    #allocation4 [shape = 's32[1]{0}', space=sflag, size = 0x4, scoped, tag = 'scoped memory for tpu_custom_call.1']
    #allocation5 [shape = 'u8[4096]{0}', space=vmem, size = 0x1000, scoped, tag = 'output window, operand 0, single buffered']
    %11 = vsyncpa [#allocation3], 0
    %12 = vsyncpa [#allocation4], 0
    // Predicated region
    $region2: #{tpu_custom_call.1} parent=1 // pred_check
      _
    $region3: #{tpu_custom_call.1} parent=1 // pred_check_branch
      %14 = sbr.rel (0) target = $region5
    $region4: #{tpu_custom_call.1} parent=1 // pred_region
      _
    $region5: #{tpu_custom_call.1} parent=1 // pred_fallthru
      _
    // Predicated region
    $region6: #{tpu_custom_call.1} parent=1 // pred_check
      _
    $region7: #{tpu_custom_call.1} parent=1 // pred_check_branch
      %16 = sbr.rel (0) target = $region9
    $region8: #{tpu_custom_call.1} parent=1 // pred_region
      %s18 = ssub.s32 2048, 2048
      %19 = vsyncadd [#allocation3], %s18
      %s20 = sshll.u32 [#allocation2], 4
      %s21 = int_to_ptr.vmem [resolvable:$true] %s20
      %26 = dma.hbm_to_vmem [thread:$0]  %s1, 2048, %s21, [#allocation3], 256, 256, 16
    $region9: #{tpu_custom_call.1} parent=1 // pred_fallthru
      _
    // Predicated region
    $region10: #{tpu_custom_call.1} parent=1 // pred_check
      _
    $region11: #{tpu_custom_call.1} parent=1 // pred_check_branch
      %28 = sbr.rel (0) target = $region13
    $region12: #{tpu_custom_call.1} parent=1 // pred_region
      _
    $region13: #{tpu_custom_call.1} parent=1 // pred_fallthru
      _
    // Predicated region
    $region14: #{tpu_custom_call.1} parent=1 // pred_check
      _
    $region15: #{tpu_custom_call.1} parent=1 // pred_check_branch
      %30 = sbr.rel (0) target = $region17
    $region16: #{tpu_custom_call.1} parent=1 // pred_region
      _
    $region17: #{tpu_custom_call.1} parent=1 // pred_fallthru
      _
    // Predicated region
    $region18: #{tpu_custom_call.1} parent=1 // pred_check
      _
    $region19: #{tpu_custom_call.1} parent=1 // pred_check_branch
      %32 = sbr.rel (0) target = $region21
    $region20: #{tpu_custom_call.1} parent=1 // pred_region
      _
    $region21: #{tpu_custom_call.1} parent=1 // pred_fallthru
      _
    // Predicated region
    $region22: #{tpu_custom_call.1} parent=1 // pred_check
      _
    $region23: #{tpu_custom_call.1} parent=1 // pred_check_branch
      %34 = sbr.rel (0) target = $region25
    $region24: #{tpu_custom_call.1} parent=1 // pred_region
      _
    $region25: #{tpu_custom_call.1} parent=1 // pred_fallthru
      _
    // Predicated region
    $region26: #{tpu_custom_call.1} parent=1 // pred_check
      _
    $region27: #{tpu_custom_call.1} parent=1 // pred_check_branch
      %36 = sbr.rel (0) target = $region29
    $region28: #{tpu_custom_call.1} parent=1 // pred_region
      %37 = dma.done [#allocation3], 2048
    $region29: #{tpu_custom_call.1} parent=1 // pred_fallthru
      _
    %v38 = vld [vmem:[%s0] sm:$0xff]
    %v39 = vld [vmem:[%s4] sm:$0xf]
    %v40 = vld [vmem:[%s5] sm:$0x1]
    %v41 = vld [vmem:[#allocation2] sm:$0xff]
    %v42 = vld [vmem:[#allocation2 + $0x8] sm:$0xff]
    %v43 = vld [vmem:[#allocation2 + $0x10] sm:$0xff]
    %v44 = vld [vmem:[#allocation2 + $0x18] sm:$0xff]
    %v45 = vld [vmem:[#allocation2 + $0x20] sm:$0xff]
    %v46 = vld [vmem:[#allocation2 + $0x28] sm:$0xff]
    %v47 = vld [vmem:[#allocation2 + $0x30] sm:$0xff]
    %v48 = vld [vmem:[#allocation2 + $0x38] sm:$0xff]
    %vm49 = vcmask 261120
    %v51 = vsel %vm49, %v38, 0
    %53 = vmatprep.subr.mxu0 %v42
    %54 = vmatpush1.msra.mxu0 %v41
    %55 = vmatprep.subr.mxu0 %v44
    %56 = vmatpush1.msra.mxu0 %v43
    %57 = vmatprep.subr.mxu0 %v46
    %58 = vmatpush1.msra.mxu0 %v45
    %59 = vmatprep.subr.mxu0 %v48
    %60 = vmatpush1.msra.mxu0 %v47
    %61 = vmatprep.subr.mxu0 0.0
    %62 = vmatpush1.msra.mxu0 0.0
    %63 = vmatprep.subr.mxu0 0.0
    %64 = vmatpush1.msra.mxu0 0.0
    %65 = vmatprep.subr.mxu0 0.0
    %66 = vmatpush1.msra.mxu0 0.0
    %67 = vmatprep.subr.mxu0 0.0
    %68 = vmatpush1.msra.mxu0 0.0
    %69 = vmatprep.subr.mxu0 0.0
    %70 = vmatpush1.msra.mxu0 0.0
    %71 = vmatprep.subr.mxu0 0.0
    %72 = vmatpush1.msra.mxu0 0.0
    %73 = vmatprep.subr.mxu0 0.0
    %74 = vmatpush1.msra.mxu0 0.0
    %75 = vmatprep.subr.mxu0 0.0
    %76 = vmatpush1.msra.mxu0 0.0
    %77 = vmatprep.subr.mxu0 0.0
    %78 = vmatpush1.msra.mxu0 0.0
    %79 = vmatprep.subr.mxu0 0.0
    %80 = vmatpush1.msra.mxu0 0.0
    %81 = vmatprep.subr.mxu0 0.0
    %82 = vmatpush1.msra.mxu0 0.0
    %83 = vmatprep.subr.mxu0 0.0
    %84 = vmatpush1.msra.mxu0 0.0
    %85 = vmatprep.subr.mxu0 0.0
    %86 = vmatpush1.msra.mxu0 0.0
    %87 = vmatprep.subr.mxu0 0.0
    %88 = vmatpush1.msra.mxu0 0.0
    %89 = vmatprep.subr.mxu0 0.0
    %90 = vmatpush1.msra.mxu0 0.0
    %91 = vmatprep.subr.mxu0 0.0
    %92 = vmatpush1.msra.mxu0 0.0
    %93 = vmatprep.subr.mxu0 0.0
    %94 = vmatpush1.msra.mxu0 0.0
    %95 = vmatprep.subr.mxu0 0.0
    %96 = vmatpush1.msra.mxu0 0.0
    %97 = vmatprep.subr.mxu0 0.0
    %98 = vmatpush1.msra.mxu0 0.0
    %99 = vmatprep.subr.mxu0 0.0
    %100 = vmatpush1.msra.mxu0 0.0
    %101 = vmatprep.subr.mxu0 0.0
    %102 = vmatpush1.msra.mxu0 0.0
    %103 = vmatprep.subr.mxu0 0.0
    %104 = vmatpush1.msra.mxu0 0.0
    %105 = vmatprep.subr.mxu0 0.0
    %106 = vmatpush1.msra.mxu0 0.0
    %107 = vmatprep.subr.mxu0 0.0
    %108 = vmatpush1.msra.mxu0 0.0
    %109 = vmatprep.subr.mxu0 0.0
    %110 = vmatpush1.msra.mxu0 0.0
    %111 = vmatprep.subr.mxu0 0.0
    %112 = vmatpush1.msra.mxu0 0.0
    %113 = vmatprep.subr.mxu0 0.0
    %114 = vmatpush1.msra.mxu0 0.0
    %115 = vmatprep.subr.mxu0 0.0
    %116 = vmatpush1.msra.mxu0 0.0
    %117 = vmatprep.mubr.f32.mxu0 0.0
    %118 = vmatmul.mubr.f32.gmra.mrb[0].mxu0 %v51
    %v119 = vpop.f32.mrb[0].mxu0
    %v120 = vadd.f32 0.0, %v119
    %v121 = vpop.f32.mrb[0].mxu0
    %v122 = vadd.f32 0.0, %v121
    %123 = vdwg.mxu0
    %v124 = vtanh.pop %v120
    %vm125 = vcmask 31744
    %v126 = vsel %vm125, %v122, -inf
    %127 = vmax.xlane.f32.xlu0 %v126
    %v128 = vpop.xlane.xlu0 %127
    %v129 = vsub.f32 %v122, %v128
    %v130 = vmul.f32 %v129, 1.442695
    %v131 = vpow.pop %v130
    %v132 = vsel %vm125, %v131, 0.0
    %133 = vadd.xlane.f32.xlu0 %v132
    %v134 = vpop.xlane.xlu0 %133
    %v135 = vrcp.pop %v134
    %v136 = vmul.f32 %v131, %v135
    %v137 = vld [vmem:[%s2] sm:$0xff]
    %v138 = vld [vmem:[%s2 + $0x8] sm:$0xff]
    %v139 = vld [vmem:[%s2 + $0x10] sm:$0xff]
    %v140 = vld [vmem:[%s2 + $0x18] sm:$0xff]
    %v141 = vld [vmem:[%s2 + $0x20] sm:$0xff]
    %v142 = vld [vmem:[%s2 + $0x28] sm:$0xff]
    %v143 = vld [vmem:[%s2 + $0x30] sm:$0xff]
    %v144 = vld [vmem:[%s2 + $0x38] sm:$0xff]
    %v145 = vld [vmem:[%s2 + $0x40] sm:$0xff]
    %v146 = vld [vmem:[%s2 + $0x48] sm:$0xff]
    %v147 = vld [vmem:[%s2 + $0x50] sm:$0xff]
    %v148 = vld [vmem:[%s2 + $0x58] sm:$0xff]
    %v149 = vld [vmem:[%s2 + $0x60] sm:$0xff]
    %v150 = vld [vmem:[%s2 + $0x68] sm:$0xff]
    %v151 = vld [vmem:[%s2 + $0x70] sm:$0xff]
    %v152 = vld [vmem:[%s2 + $0x78] sm:$0xff]
    %153 = vmatprep.subr.mxu0 0.0
    %154 = vmatpush1.msra.mxu0 %v137
    %155 = vmatprep.subr.mxu0 0.0
    %156 = vmatpush1.msra.mxu0 %v138
    %157 = vmatprep.subr.mxu0 0.0
    %158 = vmatpush1.msra.mxu0 %v139
    %159 = vmatprep.subr.mxu0 0.0
    %160 = vmatpush1.msra.mxu0 %v140
    %161 = vmatprep.subr.mxu0 0.0
    %162 = vmatpush1.msra.mxu0 %v141
    %163 = vmatprep.subr.mxu0 0.0
    %164 = vmatpush1.msra.mxu0 %v142
    %165 = vmatprep.subr.mxu0 0.0
    %166 = vmatpush1.msra.mxu0 %v143
    %167 = vmatprep.subr.mxu0 0.0
    %168 = vmatpush1.msra.mxu0 %v144
    %169 = vmatprep.subr.mxu0 0.0
    %170 = vmatpush1.msra.mxu0 %v145
    %171 = vmatprep.subr.mxu0 0.0
    %172 = vmatpush1.msra.mxu0 %v146
    %173 = vmatprep.subr.mxu0 0.0
    %174 = vmatpush1.msra.mxu0 %v147
    %175 = vmatprep.subr.mxu0 0.0
    %176 = vmatpush1.msra.mxu0 %v148
    %177 = vmatprep.subr.mxu0 0.0
    %178 = vmatpush1.msra.mxu0 %v149
    %179 = vmatprep.subr.mxu0 0.0
    %180 = vmatpush1.msra.mxu0 %v150
    %181 = vmatprep.subr.mxu0 0.0
    %182 = vmatpush1.msra.mxu0 %v151
    %183 = vmatprep.subr.mxu0 0.0
    %184 = vmatpush1.msra.mxu0 %v152
    %185 = vmatprep.subr.mxu0 0.0
    %186 = vmatpush1.msra.mxu0 0.0
    %187 = vmatprep.subr.mxu0 0.0
    %188 = vmatpush1.msra.mxu0 0.0
    %189 = vmatprep.subr.mxu0 0.0
    %190 = vmatpush1.msra.mxu0 0.0
    %191 = vmatprep.subr.mxu0 0.0
    %192 = vmatpush1.msra.mxu0 0.0
    %193 = vmatprep.subr.mxu0 0.0
    %194 = vmatpush1.msra.mxu0 0.0
    %195 = vmatprep.subr.mxu0 0.0
    %196 = vmatpush1.msra.mxu0 0.0
    %197 = vmatprep.subr.mxu0 0.0
    %198 = vmatpush1.msra.mxu0 0.0
    %199 = vmatprep.subr.mxu0 0.0
    %200 = vmatpush1.msra.mxu0 0.0
    %201 = vmatprep.subr.mxu0 0.0
    %202 = vmatpush1.msra.mxu0 0.0
    %203 = vmatprep.subr.mxu0 0.0
    %204 = vmatpush1.msra.mxu0 0.0
    %205 = vmatprep.subr.mxu0 0.0
    %206 = vmatpush1.msra.mxu0 0.0
    %207 = vmatprep.subr.mxu0 0.0
    %208 = vmatpush1.msra.mxu0 0.0
    %209 = vmatprep.subr.mxu0 0.0
    %210 = vmatpush1.msra.mxu0 0.0
    %211 = vmatprep.subr.mxu0 0.0
    %212 = vmatpush1.msra.mxu0 0.0
    %213 = vmatprep.subr.mxu0 0.0
    %214 = vmatpush1.msra.mxu0 0.0
    %215 = vmatprep.subr.mxu0 0.0
    %216 = vmatpush1.msra.mxu0 0.0
    %217 = vmatprep.mubr.f32.mxu0 0.0
    %218 = vmatmul.mubr.f32.gmra.mrb[0].mxu0 %v124
    %v219 = vpop.f32.mrb[0].mxu0
    %v220 = vadd.f32 0.0, %v219
    %v221 = vpop.f32.mrb[0].mxu0
    %222 = vdwg.mxu0
    %v223 = vtanh.pop %v220
    %v225 = vsel %vm125, %v136, 0
    %vm227 = vcmask 1043456
    %v229 = vsel %vm227, %v39, 0
    %231 = vmatprep.subr.mxu0 0.0
    %232 = vmatpush1.msra.mxu0 %v229
    %233 = vmatprep.subr.mxu0 0.0
    %234 = vmatpush1.msra.mxu0 0.0
    %235 = vmatprep.subr.mxu0 0.0
    %236 = vmatpush1.msra.mxu0 0.0
    %237 = vmatprep.subr.mxu0 0.0
    %238 = vmatpush1.msra.mxu0 0.0
    %239 = vmatprep.subr.mxu0 0.0
    %240 = vmatpush1.msra.mxu0 0.0
    %241 = vmatprep.subr.mxu0 0.0
    %242 = vmatpush1.msra.mxu0 0.0
    %243 = vmatprep.subr.mxu0 0.0
    %244 = vmatpush1.msra.mxu0 0.0
    %245 = vmatprep.subr.mxu0 0.0
    %246 = vmatpush1.msra.mxu0 0.0
    %247 = vmatprep.subr.mxu0 0.0
    %248 = vmatpush1.msra.mxu0 0.0
    %249 = vmatprep.subr.mxu0 0.0
    %250 = vmatpush1.msra.mxu0 0.0
    %251 = vmatprep.subr.mxu0 0.0
    %252 = vmatpush1.msra.mxu0 0.0
    %253 = vmatprep.subr.mxu0 0.0
    %254 = vmatpush1.msra.mxu0 0.0
    %255 = vmatprep.subr.mxu0 0.0
    %256 = vmatpush1.msra.mxu0 0.0
    %257 = vmatprep.subr.mxu0 0.0
    %258 = vmatpush1.msra.mxu0 0.0
    %259 = vmatprep.subr.mxu0 0.0
    %260 = vmatpush1.msra.mxu0 0.0
    %261 = vmatprep.subr.mxu0 0.0
    %262 = vmatpush1.msra.mxu0 0.0
    %263 = vmatprep.subr.mxu0 0.0
    %264 = vmatpush1.msra.mxu0 0.0
    %265 = vmatprep.subr.mxu0 0.0
    %266 = vmatpush1.msra.mxu0 0.0
    %267 = vmatprep.subr.mxu0 0.0
    %268 = vmatpush1.msra.mxu0 0.0
    %269 = vmatprep.subr.mxu0 0.0
    %270 = vmatpush1.msra.mxu0 0.0
    %271 = vmatprep.subr.mxu0 0.0
    %272 = vmatpush1.msra.mxu0 0.0
    %273 = vmatprep.subr.mxu0 0.0
    %274 = vmatpush1.msra.mxu0 0.0
    %275 = vmatprep.subr.mxu0 0.0
    %276 = vmatpush1.msra.mxu0 0.0
    %277 = vmatprep.subr.mxu0 0.0
    %278 = vmatpush1.msra.mxu0 0.0
    %279 = vmatprep.subr.mxu0 0.0
    %280 = vmatpush1.msra.mxu0 0.0
    %281 = vmatprep.subr.mxu0 0.0
    %282 = vmatpush1.msra.mxu0 0.0
    %283 = vmatprep.subr.mxu0 0.0
    %284 = vmatpush1.msra.mxu0 0.0
    %285 = vmatprep.subr.mxu0 0.0
    %286 = vmatpush1.msra.mxu0 0.0
    %287 = vmatprep.subr.mxu0 0.0
    %288 = vmatpush1.msra.mxu0 0.0
    %289 = vmatprep.subr.mxu0 0.0
    %290 = vmatpush1.msra.mxu0 0.0
    %291 = vmatprep.subr.mxu0 0.0
    %292 = vmatpush1.msra.mxu0 0.0
    %293 = vmatprep.subr.mxu0 0.0
    %294 = vmatpush1.msra.mxu0 0.0
    %295 = vmatprep.mubr.f32.mxu0 0.0
    %296 = vmatmul.mubr.f32.gmra.mrb[0].mxu0 %v225
    %v297 = vpop.f32.mrb[0].mxu0
    %v298 = vadd.f32 0.0, %v297
    %v299 = vpop.f32.mrb[0].mxu0
    %300 = vdwg.mxu0
    %v301 = vmul.f32 %v223, %v298
    %v302 = vld [vmem:[%s3] sm:$0xff]
    %v303 = vld [vmem:[%s3 + $0x8] sm:$0xff]
    %v304 = vld [vmem:[%s3 + $0x10] sm:$0xff]
    %v305 = vld [vmem:[%s3 + $0x18] sm:$0xff]
    %v306 = vld [vmem:[%s3 + $0x20] sm:$0xff]
    %v307 = vld [vmem:[%s3 + $0x28] sm:$0xff]
    %v308 = vld [vmem:[%s3 + $0x30] sm:$0xff]
    %v309 = vld [vmem:[%s3 + $0x38] sm:$0xff]
    %v310 = vld [vmem:[%s3 + $0x40] sm:$0xff]
    %v311 = vld [vmem:[%s3 + $0x48] sm:$0xff]
    %v312 = vld [vmem:[%s3 + $0x50] sm:$0xff]
    %v313 = vld [vmem:[%s3 + $0x58] sm:$0xff]
    %v314 = vld [vmem:[%s3 + $0x60] sm:$0xff]
    %v315 = vld [vmem:[%s3 + $0x68] sm:$0xff]
    %v316 = vld [vmem:[%s3 + $0x70] sm:$0xff]
    %v317 = vld [vmem:[%s3 + $0x78] sm:$0xff]
    %v318 = vlaneseq
    %v319 = vshrl.u32 %v318, 7
    %v320 = vsub.s32 0, %v319
    %v321 = vrot.slane %v40, %v320
    %322 = vmatprep.subr.mxu0 0.0
    %323 = vmatpush1.msra.mxu0 %v302
    %324 = vmatprep.subr.mxu0 0.0
    %325 = vmatpush1.msra.mxu0 %v303
    %326 = vmatprep.subr.mxu0 0.0
    %327 = vmatpush1.msra.mxu0 %v304
    %328 = vmatprep.subr.mxu0 0.0
    %329 = vmatpush1.msra.mxu0 %v305
    %330 = vmatprep.subr.mxu0 0.0
    %331 = vmatpush1.msra.mxu0 %v306
    %332 = vmatprep.subr.mxu0 0.0
    %333 = vmatpush1.msra.mxu0 %v307
    %334 = vmatprep.subr.mxu0 0.0
    %335 = vmatpush1.msra.mxu0 %v308
    %336 = vmatprep.subr.mxu0 0.0
    %337 = vmatpush1.msra.mxu0 %v309
    %338 = vmatprep.subr.mxu0 0.0
    %339 = vmatpush1.msra.mxu0 %v310
    %340 = vmatprep.subr.mxu0 0.0
    %341 = vmatpush1.msra.mxu0 %v311
    %342 = vmatprep.subr.mxu0 0.0
    %343 = vmatpush1.msra.mxu0 %v312
    %344 = vmatprep.subr.mxu0 0.0
    %345 = vmatpush1.msra.mxu0 %v313
    %346 = vmatprep.subr.mxu0 0.0
    %347 = vmatpush1.msra.mxu0 %v314
    %348 = vmatprep.subr.mxu0 0.0
    %349 = vmatpush1.msra.mxu0 %v315
    %350 = vmatprep.subr.mxu0 0.0
    %351 = vmatpush1.msra.mxu0 %v316
    %352 = vmatprep.subr.mxu0 0.0
    %353 = vmatpush1.msra.mxu0 %v317
    %354 = vmatprep.subr.mxu0 0.0
    %355 = vmatpush1.msra.mxu0 0.0
    %356 = vmatprep.subr.mxu0 0.0
    %357 = vmatpush1.msra.mxu0 0.0
    %358 = vmatprep.subr.mxu0 0.0
    %359 = vmatpush1.msra.mxu0 0.0
    %360 = vmatprep.subr.mxu0 0.0
    %361 = vmatpush1.msra.mxu0 0.0
    %362 = vmatprep.subr.mxu0 0.0
    %363 = vmatpush1.msra.mxu0 0.0
    %364 = vmatprep.subr.mxu0 0.0
    %365 = vmatpush1.msra.mxu0 0.0
    %366 = vmatprep.subr.mxu0 0.0
    %367 = vmatpush1.msra.mxu0 0.0
    %368 = vmatprep.subr.mxu0 0.0
    %369 = vmatpush1.msra.mxu0 0.0
    %370 = vmatprep.subr.mxu0 0.0
    %371 = vmatpush1.msra.mxu0 0.0
    %372 = vmatprep.subr.mxu0 0.0
    %373 = vmatpush1.msra.mxu0 0.0
    %374 = vmatprep.subr.mxu0 0.0
    %375 = vmatpush1.msra.mxu0 0.0
    %376 = vmatprep.subr.mxu0 0.0
    %377 = vmatpush1.msra.mxu0 0.0
    %378 = vmatprep.subr.mxu0 0.0
    %379 = vmatpush1.msra.mxu0 0.0
    %380 = vmatprep.subr.mxu0 0.0
    %381 = vmatpush1.msra.mxu0 0.0
    %382 = vmatprep.subr.mxu0 0.0
    %383 = vmatpush1.msra.mxu0 0.0
    %384 = vmatprep.subr.mxu0 0.0
    %385 = vmatpush1.msra.mxu0 0.0
    %386 = vmatprep.mubr.f32.mxu0 0.0
    %387 = vmatmul.mubr.f32.gmra.mrb[0].mxu0 %v301
    %v388 = vpop.f32.mrb[0].mxu0
    %v389 = vadd.f32 %v321, %v388
    %v390 = vpop.f32.mrb[0].mxu0
    %391 = vdwg.mxu0
    %v392 = vmul.f32 %v38, %v389
    %v393 = vadd.f32 %v392, %v38
    %v394 = vld [vmem:[%s5 + $0x1] sm:$0x1]
    %s395 = scalar_lea.vmem [#allocation2], 64
    %v396 = vld [vmem:[%s395] sm:$0xff]
    %v397 = vld [vmem:[%s395 + $0x8] sm:$0xff]
    %v398 = vld [vmem:[%s395 + $0x10] sm:$0xff]
    %v399 = vld [vmem:[%s395 + $0x18] sm:$0xff]
    %v400 = vld [vmem:[%s395 + $0x20] sm:$0xff]
    %v401 = vld [vmem:[%s395 + $0x28] sm:$0xff]
    %v402 = vld [vmem:[%s395 + $0x30] sm:$0xff]
    %v403 = vld [vmem:[%s395 + $0x38] sm:$0xff]
    %v405 = vsel %vm49, %v393, 0
    %407 = vmatprep.subr.mxu0 %v397
    %408 = vmatpush1.msra.mxu0 %v396
    %409 = vmatprep.subr.mxu0 %v399
    %410 = vmatpush1.msra.mxu0 %v398
    %411 = vmatprep.subr.mxu0 %v401
    %412 = vmatpush1.msra.mxu0 %v400
    %413 = vmatprep.subr.mxu0 %v403
    %414 = vmatpush1.msra.mxu0 %v402
    %415 = vmatprep.subr.mxu0 0.0
    %416 = vmatpush1.msra.mxu0 0.0
    %417 = vmatprep.subr.mxu0 0.0
    %418 = vmatpush1.msra.mxu0 0.0
    %419 = vmatprep.subr.mxu0 0.0
    %420 = vmatpush1.msra.mxu0 0.0
    %421 = vmatprep.subr.mxu0 0.0
    %422 = vmatpush1.msra.mxu0 0.0
    %423 = vmatprep.subr.mxu0 0.0
    %424 = vmatpush1.msra.mxu0 0.0
    %425 = vmatprep.subr.mxu0 0.0
    %426 = vmatpush1.msra.mxu0 0.0
    %427 = vmatprep.subr.mxu0 0.0
    %428 = vmatpush1.msra.mxu0 0.0
    %429 = vmatprep.subr.mxu0 0.0
    %430 = vmatpush1.msra.mxu0 0.0
    %431 = vmatprep.subr.mxu0 0.0
    %432 = vmatpush1.msra.mxu0 0.0
    %433 = vmatprep.subr.mxu0 0.0
    %434 = vmatpush1.msra.mxu0 0.0
    %435 = vmatprep.subr.mxu0 0.0
    %436 = vmatpush1.msra.mxu0 0.0
    %437 = vmatprep.subr.mxu0 0.0
    %438 = vmatpush1.msra.mxu0 0.0
    %439 = vmatprep.subr.mxu0 0.0
    %440 = vmatpush1.msra.mxu0 0.0
    %441 = vmatprep.subr.mxu0 0.0
    %442 = vmatpush1.msra.mxu0 0.0
    %443 = vmatprep.subr.mxu0 0.0
    %444 = vmatpush1.msra.mxu0 0.0
    %445 = vmatprep.subr.mxu0 0.0
    %446 = vmatpush1.msra.mxu0 0.0
    %447 = vmatprep.subr.mxu0 0.0
    %448 = vmatpush1.msra.mxu0 0.0
    %449 = vmatprep.subr.mxu0 0.0
    %450 = vmatpush1.msra.mxu0 0.0
    %451 = vmatprep.subr.mxu0 0.0
    %452 = vmatpush1.msra.mxu0 0.0
    %453 = vmatprep.subr.mxu0 0.0
    %454 = vmatpush1.msra.mxu0 0.0
    %455 = vmatprep.subr.mxu0 0.0
    %456 = vmatpush1.msra.mxu0 0.0
    %457 = vmatprep.subr.mxu0 0.0
    %458 = vmatpush1.msra.mxu0 0.0
    %459 = vmatprep.subr.mxu0 0.0
    %460 = vmatpush1.msra.mxu0 0.0
    %461 = vmatprep.subr.mxu0 0.0
    %462 = vmatpush1.msra.mxu0 0.0
    %463 = vmatprep.subr.mxu0 0.0
    %464 = vmatpush1.msra.mxu0 0.0
    %465 = vmatprep.subr.mxu0 0.0
    %466 = vmatpush1.msra.mxu0 0.0
    %467 = vmatprep.subr.mxu0 0.0
    %468 = vmatpush1.msra.mxu0 0.0
    %469 = vmatprep.subr.mxu0 0.0
    %470 = vmatpush1.msra.mxu0 0.0
    %471 = vmatprep.mubr.f32.mxu0 0.0
    %472 = vmatmul.mubr.f32.gmra.mrb[0].mxu0 %v405
    %v473 = vpop.f32.mrb[0].mxu0
    %v474 = vadd.f32 0.0, %v473
    %v475 = vpop.f32.mrb[0].mxu0
    %v476 = vadd.f32 0.0, %v475
    %477 = vdwg.mxu0
    %v478 = vtanh.pop %v474
    %v479 = vsel %vm125, %v476, -inf
    %480 = vmax.xlane.f32.xlu0 %v479
    %v481 = vpop.xlane.xlu0 %480
    %v482 = vsub.f32 %v476, %v481
    %v483 = vmul.f32 %v482, 1.442695
    %v484 = vpow.pop %v483
    %v485 = vsel %vm125, %v484, 0.0
    %486 = vadd.xlane.f32.xlu0 %v485
    %v487 = vpop.xlane.xlu0 %486
    %v488 = vrcp.pop %v487
    %v489 = vmul.f32 %v484, %v488
    %s490 = scalar_lea.vmem %s2, 128
    %v491 = vld [vmem:[%s490] sm:$0xff]
    %v492 = vld [vmem:[%s490 + $0x8] sm:$0xff]
    %v493 = vld [vmem:[%s490 + $0x10] sm:$0xff]
    %v494 = vld [vmem:[%s490 + $0x18] sm:$0xff]
    %v495 = vld [vmem:[%s490 + $0x20] sm:$0xff]
    %v496 = vld [vmem:[%s490 + $0x28] sm:$0xff]
    %v497 = vld [vmem:[%s490 + $0x30] sm:$0xff]
    %v498 = vld [vmem:[%s490 + $0x38] sm:$0xff]
    %v499 = vld [vmem:[%s490 + $0x40] sm:$0xff]
    %v500 = vld [vmem:[%s490 + $0x48] sm:$0xff]
    %v501 = vld [vmem:[%s490 + $0x50] sm:$0xff]
    %v502 = vld [vmem:[%s490 + $0x58] sm:$0xff]
    %v503 = vld [vmem:[%s490 + $0x60] sm:$0xff]
    %v504 = vld [vmem:[%s490 + $0x68] sm:$0xff]
    %v505 = vld [vmem:[%s490 + $0x70] sm:$0xff]
    %v506 = vld [vmem:[%s490 + $0x78] sm:$0xff]
    %507 = vmatprep.subr.mxu0 0.0
    %508 = vmatpush1.msra.mxu0 %v491
    %509 = vmatprep.subr.mxu0 0.0
    %510 = vmatpush1.msra.mxu0 %v492
    %511 = vmatprep.subr.mxu0 0.0
    %512 = vmatpush1.msra.mxu0 %v493
    %513 = vmatprep.subr.mxu0 0.0
    %514 = vmatpush1.msra.mxu0 %v494
    %515 = vmatprep.subr.mxu0 0.0
    %516 = vmatpush1.msra.mxu0 %v495
    %517 = vmatprep.subr.mxu0 0.0
    %518 = vmatpush1.msra.mxu0 %v496
    %519 = vmatprep.subr.mxu0 0.0
    %520 = vmatpush1.msra.mxu0 %v497
    %521 = vmatprep.subr.mxu0 0.0
    %522 = vmatpush1.msra.mxu0 %v498
    %523 = vmatprep.subr.mxu0 0.0
    %524 = vmatpush1.msra.mxu0 %v499
    %525 = vmatprep.subr.mxu0 0.0
    %526 = vmatpush1.msra.mxu0 %v500
    %527 = vmatprep.subr.mxu0 0.0
    %528 = vmatpush1.msra.mxu0 %v501
    %529 = vmatprep.subr.mxu0 0.0
    %530 = vmatpush1.msra.mxu0 %v502
    %531 = vmatprep.subr.mxu0 0.0
    %532 = vmatpush1.msra.mxu0 %v503
    %533 = vmatprep.subr.mxu0 0.0
    %534 = vmatpush1.msra.mxu0 %v504
    %535 = vmatprep.subr.mxu0 0.0
    %536 = vmatpush1.msra.mxu0 %v505
    %537 = vmatprep.subr.mxu0 0.0
    %538 = vmatpush1.msra.mxu0 %v506
    %539 = vmatprep.subr.mxu0 0.0
    %540 = vmatpush1.msra.mxu0 0.0
    %541 = vmatprep.subr.mxu0 0.0
    %542 = vmatpush1.msra.mxu0 0.0
    %543 = vmatprep.subr.mxu0 0.0
    %544 = vmatpush1.msra.mxu0 0.0
    %545 = vmatprep.subr.mxu0 0.0
    %546 = vmatpush1.msra.mxu0 0.0
    %547 = vmatprep.subr.mxu0 0.0
    %548 = vmatpush1.msra.mxu0 0.0
    %549 = vmatprep.subr.mxu0 0.0
    %550 = vmatpush1.msra.mxu0 0.0
    %551 = vmatprep.subr.mxu0 0.0
    %552 = vmatpush1.msra.mxu0 0.0
    %553 = vmatprep.subr.mxu0 0.0
    %554 = vmatpush1.msra.mxu0 0.0
    %555 = vmatprep.subr.mxu0 0.0
    %556 = vmatpush1.msra.mxu0 0.0
    %557 = vmatprep.subr.mxu0 0.0
    %558 = vmatpush1.msra.mxu0 0.0
    %559 = vmatprep.subr.mxu0 0.0
    %560 = vmatpush1.msra.mxu0 0.0
    %561 = vmatprep.subr.mxu0 0.0
    %562 = vmatpush1.msra.mxu0 0.0
    %563 = vmatprep.subr.mxu0 0.0
    %564 = vmatpush1.msra.mxu0 0.0
    %565 = vmatprep.subr.mxu0 0.0
    %566 = vmatpush1.msra.mxu0 0.0
    %567 = vmatprep.subr.mxu0 0.0
    %568 = vmatpush1.msra.mxu0 0.0
    %569 = vmatprep.subr.mxu0 0.0
    %570 = vmatpush1.msra.mxu0 0.0
    %571 = vmatprep.mubr.f32.mxu0 0.0
    %572 = vmatmul.mubr.f32.gmra.mrb[0].mxu0 %v478
    %v573 = vpop.f32.mrb[0].mxu0
    %v574 = vadd.f32 0.0, %v573
    %v575 = vpop.f32.mrb[0].mxu0
    %576 = vdwg.mxu0
    %v577 = vtanh.pop %v574
    %v579 = vsel %vm125, %v489, 0
    %581 = vmatprep.subr.mxu0 0.0
    %582 = vmatpush1.msra.mxu0 %v229
    %583 = vmatprep.subr.mxu0 0.0
    %584 = vmatpush1.msra.mxu0 0.0
    %585 = vmatprep.subr.mxu0 0.0
    %586 = vmatpush1.msra.mxu0 0.0
    %587 = vmatprep.subr.mxu0 0.0
    %588 = vmatpush1.msra.mxu0 0.0
    %589 = vmatprep.subr.mxu0 0.0
    %590 = vmatpush1.msra.mxu0 0.0
    %591 = vmatprep.subr.mxu0 0.0
    %592 = vmatpush1.msra.mxu0 0.0
    %593 = vmatprep.subr.mxu0 0.0
    %594 = vmatpush1.msra.mxu0 0.0
    %595 = vmatprep.subr.mxu0 0.0
    %596 = vmatpush1.msra.mxu0 0.0
    %597 = vmatprep.subr.mxu0 0.0
    %598 = vmatpush1.msra.mxu0 0.0
    %599 = vmatprep.subr.mxu0 0.0
    %600 = vmatpush1.msra.mxu0 0.0
    %601 = vmatprep.subr.mxu0 0.0
    %602 = vmatpush1.msra.mxu0 0.0
    %603 = vmatprep.subr.mxu0 0.0
    %604 = vmatpush1.msra.mxu0 0.0
    %605 = vmatprep.subr.mxu0 0.0
    %606 = vmatpush1.msra.mxu0 0.0
    %607 = vmatprep.subr.mxu0 0.0
    %608 = vmatpush1.msra.mxu0 0.0
    %609 = vmatprep.subr.mxu0 0.0
    %610 = vmatpush1.msra.mxu0 0.0
    %611 = vmatprep.subr.mxu0 0.0
    %612 = vmatpush1.msra.mxu0 0.0
    %613 = vmatprep.subr.mxu0 0.0
    %614 = vmatpush1.msra.mxu0 0.0
    %615 = vmatprep.subr.mxu0 0.0
    %616 = vmatpush1.msra.mxu0 0.0
    %617 = vmatprep.subr.mxu0 0.0
    %618 = vmatpush1.msra.mxu0 0.0
    %619 = vmatprep.subr.mxu0 0.0
    %620 = vmatpush1.msra.mxu0 0.0
    %621 = vmatprep.subr.mxu0 0.0
    %622 = vmatpush1.msra.mxu0 0.0
    %623 = vmatprep.subr.mxu0 0.0
    %624 = vmatpush1.msra.mxu0 0.0
    %625 = vmatprep.subr.mxu0 0.0
    %626 = vmatpush1.msra.mxu0 0.0
    %627 = vmatprep.subr.mxu0 0.0
    %628 = vmatpush1.msra.mxu0 0.0
    %629 = vmatprep.subr.mxu0 0.0
    %630 = vmatpush1.msra.mxu0 0.0
    %631 = vmatprep.subr.mxu0 0.0
    %632 = vmatpush1.msra.mxu0 0.0
    %633 = vmatprep.subr.mxu0 0.0
    %634 = vmatpush1.msra.mxu0 0.0
    %635 = vmatprep.subr.mxu0 0.0
    %636 = vmatpush1.msra.mxu0 0.0
    %637 = vmatprep.subr.mxu0 0.0
    %638 = vmatpush1.msra.mxu0 0.0
    %639 = vmatprep.subr.mxu0 0.0
    %640 = vmatpush1.msra.mxu0 0.0
    %641 = vmatprep.subr.mxu0 0.0
    %642 = vmatpush1.msra.mxu0 0.0
    %643 = vmatprep.subr.mxu0 0.0
    %644 = vmatpush1.msra.mxu0 0.0
    %645 = vmatprep.mubr.f32.mxu0 0.0
    %646 = vmatmul.mubr.f32.gmra.mrb[0].mxu0 %v579
    %v647 = vpop.f32.mrb[0].mxu0
    %v648 = vadd.f32 0.0, %v647
    %v649 = vpop.f32.mrb[0].mxu0
    %650 = vdwg.mxu0
    %v651 = vmul.f32 %v577, %v648
    %s652 = scalar_lea.vmem %s3, 128
    %v653 = vld [vmem:[%s652] sm:$0xff]
    %v654 = vld [vmem:[%s652 + $0x8] sm:$0xff]
    %v655 = vld [vmem:[%s652 + $0x10] sm:$0xff]
    %v656 = vld [vmem:[%s652 + $0x18] sm:$0xff]
    %v657 = vld [vmem:[%s652 + $0x20] sm:$0xff]
    %v658 = vld [vmem:[%s652 + $0x28] sm:$0xff]
    %v659 = vld [vmem:[%s652 + $0x30] sm:$0xff]
    %v660 = vld [vmem:[%s652 + $0x38] sm:$0xff]
    %v661 = vld [vmem:[%s652 + $0x40] sm:$0xff]
    %v662 = vld [vmem:[%s652 + $0x48] sm:$0xff]
    %v663 = vld [vmem:[%s652 + $0x50] sm:$0xff]
    %v664 = vld [vmem:[%s652 + $0x58] sm:$0xff]
    %v665 = vld [vmem:[%s652 + $0x60] sm:$0xff]
    %v666 = vld [vmem:[%s652 + $0x68] sm:$0xff]
    %v667 = vld [vmem:[%s652 + $0x70] sm:$0xff]
    %v668 = vld [vmem:[%s652 + $0x78] sm:$0xff]
    %v669 = vlaneseq
    %v670 = vshrl.u32 %v669, 7
    %v671 = vsub.s32 0, %v670
    %v672 = vrot.slane %v394, %v671
    %673 = vmatprep.subr.mxu0 0.0
    %674 = vmatpush1.msra.mxu0 %v653
    %675 = vmatprep.subr.mxu0 0.0
    %676 = vmatpush1.msra.mxu0 %v654
    %677 = vmatprep.subr.mxu0 0.0
    %678 = vmatpush1.msra.mxu0 %v655
    %679 = vmatprep.subr.mxu0 0.0
    %680 = vmatpush1.msra.mxu0 %v656
    %681 = vmatprep.subr.mxu0 0.0
    %682 = vmatpush1.msra.mxu0 %v657
    %683 = vmatprep.subr.mxu0 0.0
    %684 = vmatpush1.msra.mxu0 %v658
    %685 = vmatprep.subr.mxu0 0.0
    %686 = vmatpush1.msra.mxu0 %v659
    %687 = vmatprep.subr.mxu0 0.0
    %688 = vmatpush1.msra.mxu0 %v660
    %689 = vmatprep.subr.mxu0 0.0
    %690 = vmatpush1.msra.mxu0 %v661
    %691 = vmatprep.subr.mxu0 0.0
    %692 = vmatpush1.msra.mxu0 %v662
    %693 = vmatprep.subr.mxu0 0.0
    %694 = vmatpush1.msra.mxu0 %v663
    %695 = vmatprep.subr.mxu0 0.0
    %696 = vmatpush1.msra.mxu0 %v664
    %697 = vmatprep.subr.mxu0 0.0
    %698 = vmatpush1.msra.mxu0 %v665
    %699 = vmatprep.subr.mxu0 0.0
    %700 = vmatpush1.msra.mxu0 %v666
    %701 = vmatprep.subr.mxu0 0.0
    %702 = vmatpush1.msra.mxu0 %v667
    %703 = vmatprep.subr.mxu0 0.0
    %704 = vmatpush1.msra.mxu0 %v668
    %705 = vmatprep.subr.mxu0 0.0
    %706 = vmatpush1.msra.mxu0 0.0
    %707 = vmatprep.subr.mxu0 0.0
    %708 = vmatpush1.msra.mxu0 0.0
    %709 = vmatprep.subr.mxu0 0.0
    %710 = vmatpush1.msra.mxu0 0.0
    %711 = vmatprep.subr.mxu0 0.0
    %712 = vmatpush1.msra.mxu0 0.0
    %713 = vmatprep.subr.mxu0 0.0
    %714 = vmatpush1.msra.mxu0 0.0
    %715 = vmatprep.subr.mxu0 0.0
    %716 = vmatpush1.msra.mxu0 0.0
    %717 = vmatprep.subr.mxu0 0.0
    %718 = vmatpush1.msra.mxu0 0.0
    %719 = vmatprep.subr.mxu0 0.0
    %720 = vmatpush1.msra.mxu0 0.0
    %721 = vmatprep.subr.mxu0 0.0
    %722 = vmatpush1.msra.mxu0 0.0
    %723 = vmatprep.subr.mxu0 0.0
    %724 = vmatpush1.msra.mxu0 0.0
    %725 = vmatprep.subr.mxu0 0.0
    %726 = vmatpush1.msra.mxu0 0.0
    %727 = vmatprep.subr.mxu0 0.0
    %728 = vmatpush1.msra.mxu0 0.0
    %729 = vmatprep.subr.mxu0 0.0
    %730 = vmatpush1.msra.mxu0 0.0
    %731 = vmatprep.subr.mxu0 0.0
    %732 = vmatpush1.msra.mxu0 0.0
    %733 = vmatprep.subr.mxu0 0.0
    %734 = vmatpush1.msra.mxu0 0.0
    %735 = vmatprep.subr.mxu0 0.0
    %736 = vmatpush1.msra.mxu0 0.0
    %737 = vmatprep.mubr.f32.mxu0 0.0
    %738 = vmatmul.mubr.f32.gmra.mrb[0].mxu0 %v651
    %v739 = vpop.f32.mrb[0].mxu0
    %v740 = vadd.f32 %v672, %v739
    %v741 = vpop.f32.mrb[0].mxu0
    %742 = vdwg.mxu0
    %v743 = vmul.f32 %v38, %v740
    %v744 = vadd.f32 %v743, %v393
    %745 = vst.msk [vmem:[#allocation5] sm:$0xff] %vm49, %v744
    // Predicated region
    $region30: #{tpu_custom_call.1} parent=1 // pred_check
      _
    $region31: #{tpu_custom_call.1} parent=1 // pred_check_branch
      %747 = sbr.rel (0) target = $region33
    $region32: #{tpu_custom_call.1} parent=1 // pred_region
      %s749 = ssub.s32 128, 128
      %750 = vsyncadd [#allocation4], %s749
      %s752 = sshll.u32 [#allocation5], 4
      %s753 = int_to_ptr.vmem [resolvable:$true] %s752
      %755 = dma.vmem_to_hbm [thread:$0]  %s753, 128, %s6, [#allocation4]
    $region33: #{tpu_custom_call.1} parent=1 // pred_fallthru
      _
    // Predicated region
    $region34: #{tpu_custom_call.1} parent=1 // pred_check
      _
    $region35: #{tpu_custom_call.1} parent=1 // pred_check_branch
      %757 = sbr.rel (0) target = $region37
    $region36: #{tpu_custom_call.1} parent=1 // pred_region
      %758 = dma.done [#allocation4], 128
    $region37: #{tpu_custom_call.1} parent=1 // pred_fallthru
      _
    %759 = vsyncpa [#allocation3], 1
    %760 = vsyncpa [#allocation4], 1

</llo_original>
